<compile_context>
chip_gen: v7x
topology: tpu7x:2x2x1
jax: 0.10.0
libtpu: 0.0.40
codegen_flags: <defaults>
</compile_context>

<pallas_src>
import math

import numpy as np
import jax
import jax.numpy as jnp
from jax.experimental import pallas as pl
from jax.experimental.pallas import tpu as pltpu

LN_EPS = 1e-5                              # PyTorch nn.LayerNorm default
_FALLBACK_VMEM_BYTES = 64 * 1024 * 1024    # v7x per-TensorCore physical VMEM
_INV_SQRT2 = 1.0 / math.sqrt(2.0)


def _round_up(x, m):
    return ((x + m - 1) // m) * m


# -------------------------- hardware-aware sizing ----------------------------

def _vmem_limit_bytes():
    """Generation-aware VMEM budget: ~85% of physical per-core VMEM.

    v5e/v6e (128 MiB) -> ~108 MiB; v7x (64 MiB) -> ~54 MiB.  The 15% headroom
    covers Mosaic internal scratch, spills and DMA descriptors.
    """
    cap = _FALLBACK_VMEM_BYTES
    try:
        info = pltpu.get_tpu_info()
        cap = int(getattr(info, "vmem_capacity_bytes", cap) or cap)
    except Exception:   # no TPU / interpret-mode emulation
        pass
    return int(cap * 0.85)


def _pick_row_tile(rows, C, H, vmem_limit, single_buffer):
    """Largest block-kernel row tile whose footprint fits the VMEM budget."""
    w_bufs = 1 if single_buffer else 2
    weight_bytes = w_bufs * 2 * (C * C + C * H + H * C)        # bf16 weights
    budget = int(vmem_limit * 0.6) - weight_bytes              # temp headroom
    rt = 8
    for cand in (512, 256, 128, 64, 32, 16, 8):
        act_bytes = (cand * C * 2 * 2 * 2            # bf16 in/out tiles, 2x-buffered
                     + cand * (H + 4 * C) * 4)       # dominant fp32 intermediates
        if act_bytes <= budget:
            rt = cand
            break
    rt = min(rt, _round_up(rows, 8))
    if rows > 8:   # keep >=2 row tiles so the parallel axis can use both v7x TCs
        rt = min(rt, _round_up((rows + 1) // 2, 8))
    return max(rt, 8)


def _pick_head_row_tile(rows, C, tile_v, vmem_limit):
    """Head has no 4C intermediate, so it can afford a much larger row tile."""
    budget = int(vmem_limit * 0.6)
    rt = 8
    for cand in (1024, 512, 256, 128, 64, 32, 16, 8):
        need = (cand * C * 2 * 2            # bf16 x tiles, double-buffered
                + C * tile_v * 2 * 2        # bf16 w_head tiles, double-buffered
                + cand * tile_v * 4 * 2     # logits tiles (fp32 worst case)
                + cand * C * 2)             # cached ln_f(x) scratch (bf16)
        if need <= budget:
            rt = cand
            break
    rt = min(rt, _round_up(rows, 8))
    if rows > 8:
        rt = min(rt, _round_up((rows + 1) // 2, 8))
    return max(rt, 8)


def _inv_spec(block_shape, index_map, single_buffer=True):
    """BlockSpec for a grid-invariant operand (same block every grid step).

    Single-buffer it when supported: default double-buffering burns 2x VMEM on
    weights that are never re-fetched.
    """
    if single_buffer:
        try:
            return pl.BlockSpec(block_shape, index_map,
                                pipeline_mode=pl.Buffered(1))
        except (TypeError, ValueError):
            pass
    return pl.BlockSpec(block_shape, index_map)


def _single_buffer_supported():
    """Feature-probe pl.Buffered(1) with a tiny kernel; fall back if rejected."""
    try:
        def k(x_ref, b_ref, o_ref):
            o_ref[...] = x_ref[...] + b_ref[...]

        f = pl.pallas_call(
            k,
            out_shape=jax.ShapeDtypeStruct((16, 128), jnp.float32),
            grid=(2,),
            in_specs=[pl.BlockSpec((8, 128), lambda i: (i, 0)),
                      pl.BlockSpec((8, 128), lambda i: (0, 0),
                                   pipeline_mode=pl.Buffered(1))],
            out_specs=pl.BlockSpec((8, 128), lambda i: (i, 0)),
        )
        jax.block_until_ready(f(jnp.zeros((16, 128), jnp.float32),
                                jnp.ones((8, 128), jnp.float32)))
        return True
    except Exception:
        return False


# ------------------------- shared math helpers --------------------------------
# These are used by BOTH the Pallas kernels and the pure-JAX reference so the
# only numerical differences are MXU accumulation order and the EUP approx
# reciprocal (enabled only inside the kernels).

def _erf(x, *, approx_recip=False):
    # Abramowitz & Stegun 7.1.26 (|err| < 1.5e-7), VPU/EUP-friendly ops only.
    a1, a2, a3, a4, a5 = (0.254829592, -0.284496736, 1.421413741,
                          -1.453152027, 1.061405429)
    p = 0.3275911
    s = jnp.where(x < 0.0, -1.0, 1.0)           # select, not jnp.sign
    ax = jnp.abs(x)
    denom = 1.0 + p * ax
    t = pl.reciprocal(denom, approx=True) if approx_recip else 1.0 / denom
    poly = ((((a5 * t + a4) * t + a3) * t + a2) * t + a1) * t
    return s * (1.0 - poly * jnp.exp(-ax * ax))


def _gelu_exact(x, *, approx_recip=False):
    # nn.GELU() default (erf form): 0.5 * x * (1 + erf(x / sqrt(2)))
    return 0.5 * x * (1.0 + _erf(x * _INV_SQRT2, approx_recip=approx_recip))


def _layernorm(v, g, b):
    mu = jnp.mean(v, axis=-1, keepdims=True)
    d = v - mu
    var = jnp.mean(d * d, axis=-1, keepdims=True)
    return d * jax.lax.rsqrt(var + LN_EPS) * g + b


def _q(v):
    """Mirror the kernel's bf16 storage / MXU-operand quantization points."""
    return v.astype(jnp.bfloat16).astype(jnp.float32)


# --------------------------------- kernels ------------------------------------

def block_kernel(x_ref, dft_ref, pp_ref, b1_ref, w1_ref, w2_ref, o_ref):
    """One Block: x += LN(DFTcos(LN1(x))); x += MLP(LN2(x)).

    x_ref: (row_tile, C) bf16 activations.
    dft_ref/w1_ref/w2_ref: bf16 weights (MXU operands), single-buffered.
    pp_ref: (8, C) fp32 packed [ln1_g, ln1_b, lna_g, lna_b, ln2_g, ln2_b, b2, 0].
    b1_ref: (1, 4C) fp32 bias.
    """
    x = x_ref[...].astype(jnp.float32)

    pp = pp_ref[...]
    ln1_g, ln1_b = pp[0:1, :], pp[1:2, :]
    lna_g, lna_b = pp[2:3, :], pp[3:4, :]
    ln2_g, ln2_b = pp[4:5, :], pp[5:6, :]
    b2 = pp[6:7, :]

    # Fourier "attention": cosine-DFT over channels, then its own LayerNorm.
    h1 = _layernorm(x, ln1_g, ln1_b)
    four = jnp.dot(h1.astype(jnp.bfloat16), dft_ref[...],
                   preferred_element_type=jnp.float32)
    x = x + _layernorm(four, lna_g, lna_b)

    # MLP: Linear(C,4C) -> GELU(erf) -> Linear(4C,C).  Dropout(p=0) == id.
    h2 = _layernorm(x, ln2_g, ln2_b)
    z = jnp.dot(h2.astype(jnp.bfloat16), w1_ref[...],
                preferred_element_type=jnp.float32) + b1_ref[...]
    z = _gelu_exact(z, approx_recip=True)
    mlp = jnp.dot(z.astype(jnp.bfloat16), w2_ref[...],
                  preferred_element_type=jnp.float32) + b2

    o_ref[...] = (x + mlp).astype(o_ref.dtype)


def head_kernel(x_ref, lnf_ref, wh_ref, o_ref, h_ref):
    """ln_f once per row tile (cached in VMEM), then pure matmul per vocab tile."""
    @pl.when(pl.program_id(1) == 0)
    def _():
        x = x_ref[...].astype(jnp.float32)
        h_ref[...] = _layernorm(x, lnf_ref[0:1, :],
                                lnf_ref[1:2, :]).astype(jnp.bfloat16)

    o_ref[...] = jnp.dot(h_ref[...], wh_ref[...],
                         preferred_element_type=jnp.float32).astype(o_ref.dtype)


# --------------------------------- wrappers -----------------------------------

def run_block(x2d, dft_bf16, pp, b1, w1, w2, *, row_tile, vmem_limit,
              single_buffer):
    rows_pad, C = x2d.shape
    H = w1.shape[1]

    def inv(shape):
        return _inv_spec(shape, lambda i: (0, 0), single_buffer)

    in_specs = [
        pl.BlockSpec((row_tile, C), lambda i: (i, 0)),   # activations (row-tiled)
        inv((C, C)),                                     # cosine-DFT matrix
        inv((8, C)),                                     # packed LN params + b2
        inv((1, H)),                                     # mlp bias b1
        inv((C, H)),                                     # mlp W1
        inv((H, C)),                                     # mlp W2
    ]
    out_specs = pl.BlockSpec((row_tile, C), lambda i: (i, 0))
    return pl.pallas_call(
        block_kernel,
        out_shape=jax.ShapeDtypeStruct((rows_pad, C), x2d.dtype),
        grid_spec=pltpu.PrefetchScalarGridSpec(
            num_scalar_prefetch=0,
            grid=(rows_pad // row_tile,),
            in_specs=in_specs,
            out_specs=out_specs,
        ),
        input_output_aliases={0: 0},   # residual stream updated in place
        compiler_params=pltpu.CompilerParams(
            dimension_semantics=("parallel",),
            vmem_limit_bytes=vmem_limit),
    )(x2d, dft_bf16, pp, b1, w1, w2)


def run_head(x2d, lnf, w_head, *, row_tile, tile_v, vmem_limit, single_buffer,
             out_dtype):
    rows_pad, C = x2d.shape
    V_pad = w_head.shape[1]
    in_specs = [
        pl.BlockSpec((row_tile, C), lambda i, j: (i, 0)),
        _inv_spec((2, C), lambda i, j: (0, 0), single_buffer),   # [lnf_g, lnf_b]
        pl.BlockSpec((C, tile_v), lambda i, j: (0, j)),          # vocab-tiled head
    ]
    out_specs = pl.BlockSpec((row_tile, tile_v), lambda i, j: (i, j))
    return pl.pallas_call(
        head_kernel,
        out_shape=jax.ShapeDtypeStruct((rows_pad, V_pad), out_dtype),
        grid_spec=pltpu.PrefetchScalarGridSpec(
            num_scalar_prefetch=0,
            grid=(rows_pad // row_tile, V_pad // tile_v),
            in_specs=in_specs,
            out_specs=out_specs,
            scratch_shapes=[pltpu.VMEM((row_tile, C), jnp.bfloat16)],
        ),
        compiler_params=pltpu.CompilerParams(
            # vocab axis is "arbitrary": the cached ln_f(x) scratch carries
            # state across it (filled at j == 0).
            dimension_semantics=("parallel", "arbitrary"),
            vmem_limit_bytes=vmem_limit),
    )(x2d, lnf, w_head)


def prepare_params(params):
    """Pack per-block params and cast matmul weights to bf16."""
    blocks = []
    for blk in params["blocks"]:
        pp = jnp.stack([blk["ln1_g"], blk["ln1_b"],
                        blk["lna_g"], blk["lna_b"],
                        blk["ln2_g"], blk["ln2_b"],
                        blk["b2"], jnp.zeros_like(blk["b2"])],
                       axis=0).astype(jnp.float32)               # (8, C)
        blocks.append({
            "pp": pp,
            "b1": blk["b1"].reshape(1, -1).astype(jnp.float32),   # (1, 4C)
            "w1": blk["w1"].astype(jnp.bfloat16),
            "w2": blk["w2"].astype(jnp.bfloat16),
        })
    lnf = jnp.stack([params["lnf_g"], params["lnf_b"]], axis=0).astype(jnp.float32)
    w_head = params["w_head"].astype(jnp.bfloat16)
    return blocks, lnf, w_head


def fourier_gpt_forward(tokens, params, dft, *, single_buffer_weights=True,
                        logits_dtype=jnp.float32):
    """tokens: int32 [B, T].  Returns logits [B, T, vocab] in `logits_dtype`."""
    B, T = tokens.shape
    C = params["tok_emb"].shape[1]
    V = params["w_head"].shape[1]
    H = params["blocks"][0]["w1"].shape[1] if params["blocks"] else 4 * C
    rows = B * T

    vmem_limit = _vmem_limit_bytes()
    blocks, lnf, w_head = prepare_params(params)
    dft_bf16 = dft.astype(jnp.bfloat16)

    # Glue: embedding gather + positional add (Dropout(p=0) is identity).
    x = params["tok_emb"][tokens] + params["pos_emb"][:, :T]
    x2d = x.reshape(rows, C).astype(jnp.bfloat16)

    # Generation-aware row tile; tail rows zero-padded (sliced off at the end).
    rt = _pick_row_tile(rows, C, H, vmem_limit, single_buffer_weights)
    rows_pad = _round_up(rows, rt)
    if rows_pad != rows:
        x2d = jnp.pad(x2d, ((0, rows_pad - rows), (0, 0)))

    for blk in blocks:
        x2d = run_block(x2d, dft_bf16, blk["pp"], blk["b1"], blk["w1"], blk["w2"],
                        row_tile=rt, vmem_limit=vmem_limit,
                        single_buffer=single_buffer_weights)

    # Head: pad vocab to a multiple of tile_v (lane-dense stores); head uses a
    # larger, independently chosen row tile (no 4C intermediate to hold).
    tile_v = min(1024, _round_up(V, 128))
    V_pad = _round_up(V, tile_v)
    if V_pad != V:
        w_head = jnp.pad(w_head, ((0, 0), (0, V_pad - V)))
    rt_h = _pick_head_row_tile(rows, C, tile_v, vmem_limit)
    rows_pad_h = _round_up(rows_pad, rt_h)
    if rows_pad_h != rows_pad:
        x2d = jnp.pad(x2d, ((0, rows_pad_h - rows_pad), (0, 0)))

    logits = run_head(x2d, lnf, w_head, row_tile=rt_h, tile_v=tile_v,
                      vmem_limit=vmem_limit, single_buffer=single_buffer_weights,
                      out_dtype=logits_dtype)
    return logits[:rows, :V].reshape(B, T, V)


# ------------------------------ parameter setup --------------------------------

def cosine_dft_matrix(C):
    k = np.arange(C)[:, None].astype(np.float64)
    c = np.arange(C)[None, :].astype(np.float64)
    return jnp.asarray(np.cos(2.0 * np.pi * k * c / C), dtype=jnp.float32)


def init_params(key, dim, depth, seq_len, vocab_size):
    keys = jax.random.split(key, 2 + 4 * depth + 1)
    ki = iter(keys)

    def uniform(k, shape, fan_in):
        bound = 1.0 / math.sqrt(fan_in)
        return jax.random.uniform(k, shape, jnp.float32, -bound, bound)

    params = {
        "tok_emb": jax.random.normal(next(ki), (vocab_size, dim), jnp.float32),
        "pos_emb": jnp.zeros((1, seq_len, dim), jnp.float32),
        "lnf_g": jnp.ones((dim,), jnp.float32),
        "lnf_b": jnp.zeros((dim,), jnp.float32),
        # head: nn.Linear(dim, vocab, bias=False); stored as [in, out]
        "w_head": uniform(next(ki), (dim, vocab_size), dim),
        "blocks": [],
    }
    for _ in range(depth):
        blk = {
            "ln1_g": jnp.ones((dim,), jnp.float32),
            "ln1_b": jnp.zeros((dim,), jnp.float32),
            "lna_g": jnp.ones((dim,), jnp.float32),   # Fourier.ln
            "lna_b": jnp.zeros((dim,), jnp.float32),
            "ln2_g": jnp.ones((dim,), jnp.float32),
            "ln2_b": jnp.zeros((dim,), jnp.float32),
            "w1": uniform(next(ki), (dim, 4 * dim), dim),
            "b1": uniform(next(ki), (4 * dim,), dim),
            "w2": uniform(next(ki), (4 * dim, dim), 4 * dim),
            "b2": uniform(next(ki), (dim,), 4 * dim),
        }
        params["blocks"].append(blk)
    return params


# ------------------------------ pure-JAX reference ------------------------------

def reference_forward(tokens, params, dft):
    """Mirror of the kernel math (same LN/GELU helpers, same bf16 quantization
    points); matmuls at HIGHEST precision so the only differences vs the Pallas
    path are MXU accumulation order and the in-kernel EUP approx reciprocal."""
    hi = jax.lax.Precision.HIGHEST
    B, T = tokens.shape
    x = params["tok_emb"][tokens] + params["pos_emb"][:, :T]
    x = _q(x)
    for blk in params["blocks"]:
        h1 = _layernorm(x, blk["ln1_g"], blk["ln1_b"])
        four = jnp.einsum("btk,kc->btc", _q(h1), _q(dft), precision=hi)
        x = x + _layernorm(four, blk["lna_g"], blk["lna_b"])
        h2 = _layernorm(x, blk["ln2_g"], blk["ln2_b"])
        z = jnp.einsum("btc,ch->bth", _q(h2), _q(blk["w1"]), precision=hi) + blk["b1"]
        z = _gelu_exact(z)
        mlp = jnp.einsum("bth,hc->btc", _q(z), _q(blk["w2"]), precision=hi) + blk["b2"]
        x = _q(x + mlp)
    h = _layernorm(x, params["lnf_g"], params["lnf_b"])
    return jnp.einsum("btc,cv->btv", _q(h), _q(params["w_head"]), precision=hi)


# ----------------------------------- main ---------------------------------------

if __name__ == "__main__":
    DIM, DEPTH, SEQ_LEN, VOCAB = 32, 3, 8, 39
    BATCH, T = 2, 8

    key = jax.random.PRNGKey(0)
    kp, kt = jax.random.split(key)
    params = init_params(kp, DIM, DEPTH, SEQ_LEN, VOCAB)
    dft = cosine_dft_matrix(DIM)
    tokens = jax.random.randint(kt, (BATCH, T), 0, VOCAB, dtype=jnp.int32)

    single_buffer = _single_buffer_supported()

    fwd = jax.jit(lambda t: fourier_gpt_forward(
        t, params, dft, single_buffer_weights=single_buffer))
    logits = jax.block_until_ready(fwd(tokens))

    assert logits.shape == (BATCH, T, VOCAB)
    assert bool(jnp.all(jnp.isfinite(logits)))

    ref = jax.block_until_ready(reference_forward(tokens, params, dft))
    # bf16 residual stream + MXU accumulation order + the EUP approx reciprocal
    # in erf mean the kernel is not bit-identical to the mirrored reference;
    # observed drift is ~5e-3 on O(1) logits, so 2e-2 is a safe, meaningful bound.
    np.testing.assert_allclose(np.asarray(logits, dtype=np.float32),
                               np.asarray(ref, dtype=np.float32),
                               rtol=2e-2, atol=2e-2)

    print("KERNEL_OK")
</pallas_src>

<mosaic_0001>
module attributes {stable_mosaic.version = 11 : i64} {
  func.func @k(%arg0: i32, %arg1: memref<8x128xf32, #tpu.memory_space<vmem>>, %arg2: memref<8x128xf32, #tpu.memory_space<vmem>>, %arg3: memref<8x128xf32, #tpu.memory_space<vmem>>) attributes {dimension_semantics = [#tpu.dimension_semantics<arbitrary>], iteration_bounds = array<i64: 2>, scalar_prefetch = 0 : i64, scratch_operands = 0 : i64, tpu.core_type = #tpu.core_type<tc>, window_params = [{transform_indices = @transform_0, window_bounds = array<i64: 8, 128>}, {pipeline_mode = #tpu.pipeline_mode<synchronous>, transform_indices = @transform_1, window_bounds = array<i64: 8, 128>}, {transform_indices = @transform_2, window_bounds = array<i64: 8, 128>}]} {
    %c0 = arith.constant 0 : index
    %c0_0 = arith.constant 0 : index
    %0 = vector.load %arg1[%c0, %c0_0] : memref<8x128xf32, #tpu.memory_space<vmem>>, vector<8x128xf32>
    %c0_1 = arith.constant 0 : index
    %c0_2 = arith.constant 0 : index
    %1 = vector.load %arg2[%c0_1, %c0_2] : memref<8x128xf32, #tpu.memory_space<vmem>>, vector<8x128xf32>
    %2 = arith.addf %0, %1 : vector<8x128xf32>
    %c0_3 = arith.constant 0 : index
    %c0_4 = arith.constant 0 : index
    %3 = vector.load %arg3[%c0_3, %c0_4] : memref<8x128xf32, #tpu.memory_space<vmem>>, vector<8x128xf32>
    tpu.vector_store %arg3[%c0_3, %c0_4], %2 {strides = array<i32>} : memref<8x128xf32, #tpu.memory_space<vmem>>, vector<8x128xf32>,
    return
  }
  func.func @transform_0(%arg0: i32) -> (i32, i32) {
    %c0_i32 = arith.constant 0 : i32
    %c0_i32_0 = arith.constant 0 : i32
    return %arg0, %c0_i32 : i32, i32
  }
  func.func @transform_1(%arg0: i32) -> (i32, i32) {
    %c0_i32 = arith.constant 0 : i32
    %c0_i32_0 = arith.constant 0 : i32
    %c0_i32_1 = arith.constant 0 : i32
    return %c0_i32, %c0_i32_0 : i32, i32
  }
  func.func @transform_2(%arg0: i32) -> (i32, i32) {
    %c0_i32 = arith.constant 0 : i32
    %c0_i32_0 = arith.constant 0 : i32
    return %arg0, %c0_i32 : i32, i32
  }
}

module attributes {stable_mosaic.version = 11 : i64} {
  func.func @head_kernel(%arg0: i32, %arg1: i32, %arg2: memref<8x32xbf16, #tpu.memory_space<vmem>>, %arg3: memref<2x32xf32, #tpu.memory_space<vmem>>, %arg4: memref<32x128xbf16, #tpu.memory_space<vmem>>, %arg5: memref<8x128xf32, #tpu.memory_space<vmem>>, %arg6: memref<8x32xbf16, #tpu.memory_space<vmem>>) attributes {dimension_semantics = [#tpu.dimension_semantics<parallel>, #tpu.dimension_semantics<arbitrary>], iteration_bounds = array<i64: 2, 1>, scalar_prefetch = 0 : i64, scratch_operands = 1 : i64, tpu.core_type = #tpu.core_type<tc>, window_params = [{transform_indices = @transform_0, window_bounds = array<i64: 8, 32>}, {pipeline_mode = #tpu.pipeline_mode<synchronous>, transform_indices = @transform_1, window_bounds = array<i64: 2, 32>}, {transform_indices = @transform_2, window_bounds = array<i64: 32, 128>}, {transform_indices = @transform_3, window_bounds = array<i64: 8, 128>}]} {
    %c0_i32 = arith.constant 0 : i32
    %0 = arith.cmpi eq, %arg1, %c0_i32 : i32
    %1 = arith.extui %0 : i1 to i32
    %c0_i32_0 = arith.constant 0 : i32
    %2 = arith.cmpi ne, %1, %c0_i32_0 : i32
    scf.if %2 {
      %c0_6 = arith.constant 0 : index
      %c0_7 = arith.constant 0 : index
      %7 = vector.load %arg2[%c0_6, %c0_7] : memref<8x32xbf16, #tpu.memory_space<vmem>>, vector<8x32xbf16>
      %8 = arith.extf %7 : vector<8x32xbf16> to vector<8x32xf32>
      %c0_8 = arith.constant 0 : index
      %c0_9 = arith.constant 0 : index
      %9 = vector.load %arg3[%c0_8, %c0_9] : memref<2x32xf32, #tpu.memory_space<vmem>>, vector<1x32xf32>
      %c1 = arith.constant 1 : index
      %c0_10 = arith.constant 0 : index
      %10 = vector.load %arg3[%c1, %c0_10] : memref<2x32xf32, #tpu.memory_space<vmem>>, vector<1x32xf32>
      %cst_11 = arith.constant dense<0.000000e+00> : vector<8xf32>
      %11 = vector.multi_reduction <add>, %8, %cst_11 [1] : vector<8x32xf32> to vector<8xf32>
      %12 = vector.shape_cast %11 : vector<8xf32> to vector<8x1xf32>
      %cst_12 = arith.constant 3.200000e+01 : f32
      %13 = vector.broadcast %cst_12 : f32 to vector<8x1xf32>
      %14 = arith.divf %12, %13 : vector<8x1xf32>
      %15 = vector.broadcast %14 : vector<8x1xf32> to vector<8x32xf32>
      %16 = arith.subf %8, %15 : vector<8x32xf32>
      %17 = arith.mulf %16, %16 : vector<8x32xf32>
      %cst_13 = arith.constant dense<0.000000e+00> : vector<8xf32>
      %18 = vector.multi_reduction <add>, %17, %cst_13 [1] : vector<8x32xf32> to vector<8xf32>
      %19 = vector.shape_cast %18 : vector<8xf32> to vector<8x1xf32>
      %cst_14 = arith.constant 3.200000e+01 : f32
      %20 = vector.broadcast %cst_14 : f32 to vector<8x1xf32>
      %21 = arith.divf %19, %20 : vector<8x1xf32>
      %cst_15 = arith.constant 9.99999974E-6 : f32
      %22 = vector.broadcast %cst_15 : f32 to vector<8x1xf32>
      %23 = arith.addf %21, %22 : vector<8x1xf32>
      %24 = math.rsqrt %23 : vector<8x1xf32>
      %25 = vector.broadcast %24 : vector<8x1xf32> to vector<8x32xf32>
      %26 = arith.mulf %16, %25 : vector<8x32xf32>
      %27 = vector.broadcast %9 : vector<1x32xf32> to vector<8x32xf32>
      %28 = arith.mulf %26, %27 : vector<8x32xf32>
      %29 = vector.broadcast %10 : vector<1x32xf32> to vector<8x32xf32>
      %30 = arith.addf %28, %29 : vector<8x32xf32>
      %31 = arith.truncf %30 : vector<8x32xf32> to vector<8x32xbf16>
      %c0_16 = arith.constant 0 : index
      %c0_17 = arith.constant 0 : index
      %32 = vector.load %arg6[%c0_16, %c0_17] : memref<8x32xbf16, #tpu.memory_space<vmem>>, vector<8x32xbf16>
      tpu.vector_store %arg6[%c0_16, %c0_17], %31 {strides = array<i32>} : memref<8x32xbf16, #tpu.memory_space<vmem>>, vector<8x32xbf16>,
    } else {
    }
    %c0 = arith.constant 0 : index
    %c0_1 = arith.constant 0 : index
    %3 = vector.load %arg6[%c0, %c0_1] : memref<8x32xbf16, #tpu.memory_space<vmem>>, vector<8x32xbf16>
    %c0_2 = arith.constant 0 : index
    %c0_3 = arith.constant 0 : index
    %4 = vector.load %arg4[%c0_2, %c0_3] : memref<32x128xbf16, #tpu.memory_space<vmem>>, vector<32x128xbf16>
    %cst = arith.constant dense<0.000000e+00> : vector<8x128xf32>
    %5 = tpu.matmul %3, %4, %cst {dimension_numbers = #tpu.dot_dimension_numbers<[1], [0], [0], [1], [0, 0, 1, 1], [], []>} : vector<8x32xbf16>, vector<32x128xbf16>, vector<8x128xf32> -> vector<8x128xf32>
    %c0_4 = arith.constant 0 : index
    %c0_5 = arith.constant 0 : index
    %6 = vector.load %arg5[%c0_4, %c0_5] : memref<8x128xf32, #tpu.memory_space<vmem>>, vector<8x128xf32>
    tpu.vector_store %arg5[%c0_4, %c0_5], %5 {strides = array<i32>} : memref<8x128xf32, #tpu.memory_space<vmem>>, vector<8x128xf32>,
    return
  }
  func.func @transform_0(%arg0: i32, %arg1: i32) -> (i32, i32) {
    %c0_i32 = arith.constant 0 : i32
    %c0_i32_0 = arith.constant 0 : i32
    return %arg0, %c0_i32 : i32, i32
  }
  func.func @transform_1(%arg0: i32, %arg1: i32) -> (i32, i32) {
    %c0_i32 = arith.constant 0 : i32
    %c0_i32_0 = arith.constant 0 : i32
    %c0_i32_1 = arith.constant 0 : i32
    return %c0_i32, %c0_i32_0 : i32, i32
  }
  func.func @transform_2(%arg0: i32, %arg1: i32) -> (i32, i32) {
    %c0_i32 = arith.constant 0 : i32
    %c0_i32_0 = arith.constant 0 : i32
    return %c0_i32, %arg1 : i32, i32
  }
  func.func @transform_3(%arg0: i32, %arg1: i32) -> (i32, i32) {
    %c0_i32 = arith.constant 0 : i32
    return %arg0, %arg1 : i32, i32
  }
}

module attributes {stable_mosaic.version = 11 : i64} {
  func.func @block_kernel(%arg0: i32, %arg1: memref<8x32xbf16, #tpu.memory_space<vmem>>, %arg2: memref<32x32xbf16, #tpu.memory_space<vmem>>, %arg3: memref<8x32xf32, #tpu.memory_space<vmem>>, %arg4: memref<1x128xf32, #tpu.memory_space<vmem>>, %arg5: memref<32x128xbf16, #tpu.memory_space<vmem>>, %arg6: memref<128x32xbf16, #tpu.memory_space<vmem>>, %arg7: memref<8x32xbf16, #tpu.memory_space<vmem>>) attributes {dimension_semantics = [#tpu.dimension_semantics<parallel>], iteration_bounds = array<i64: 2>, scalar_prefetch = 0 : i64, scratch_operands = 0 : i64, tpu.core_type = #tpu.core_type<tc>, window_params = [{transform_indices = @transform_0, window_bounds = array<i64: 8, 32>}, {pipeline_mode = #tpu.pipeline_mode<synchronous>, transform_indices = @transform_1, window_bounds = array<i64: 32, 32>}, {pipeline_mode = #tpu.pipeline_mode<synchronous>, transform_indices = @transform_2, window_bounds = array<i64: 8, 32>}, {pipeline_mode = #tpu.pipeline_mode<synchronous>, transform_indices = @transform_3, window_bounds = array<i64: 1, 128>}, {pipeline_mode = #tpu.pipeline_mode<synchronous>, transform_indices = @transform_4, window_bounds = array<i64: 32, 128>}, {pipeline_mode = #tpu.pipeline_mode<synchronous>, transform_indices = @transform_5, window_bounds = array<i64: 128, 32>}, {transform_indices = @transform_6, window_bounds = array<i64: 8, 32>}]} {
    %c0 = arith.constant 0 : index
    %c0_0 = arith.constant 0 : index
    %0 = vector.load %arg1[%c0, %c0_0] : memref<8x32xbf16, #tpu.memory_space<vmem>>, vector<8x32xbf16>
    %1 = arith.extf %0 : vector<8x32xbf16> to vector<8x32xf32>
    %c0_1 = arith.constant 0 : index
    %c0_2 = arith.constant 0 : index
    %2 = vector.load %arg3[%c0_1, %c0_2] : memref<8x32xf32, #tpu.memory_space<vmem>>, vector<8x32xf32>
    %3 = vector.extract_strided_slice %2 {offsets = [0, 0], sizes = [1, 32], strides = [1, 1]} : vector<8x32xf32> to vector<1x32xf32>
    %4 = vector.extract_strided_slice %2 {offsets = [1, 0], sizes = [1, 32], strides = [1, 1]} : vector<8x32xf32> to vector<1x32xf32>
    %5 = vector.extract_strided_slice %2 {offsets = [2, 0], sizes = [1, 32], strides = [1, 1]} : vector<8x32xf32> to vector<1x32xf32>
    %6 = vector.extract_strided_slice %2 {offsets = [3, 0], sizes = [1, 32], strides = [1, 1]} : vector<8x32xf32> to vector<1x32xf32>
    %7 = vector.extract_strided_slice %2 {offsets = [4, 0], sizes = [1, 32], strides = [1, 1]} : vector<8x32xf32> to vector<1x32xf32>
    %8 = vector.extract_strided_slice %2 {offsets = [5, 0], sizes = [1, 32], strides = [1, 1]} : vector<8x32xf32> to vector<1x32xf32>
    %9 = vector.extract_strided_slice %2 {offsets = [6, 0], sizes = [1, 32], strides = [1, 1]} : vector<8x32xf32> to vector<1x32xf32>
    %cst = arith.constant dense<0.000000e+00> : vector<8xf32>
    %10 = vector.multi_reduction <add>, %1, %cst [1] : vector<8x32xf32> to vector<8xf32>
    %11 = vector.shape_cast %10 : vector<8xf32> to vector<8x1xf32>
    %cst_3 = arith.constant 3.200000e+01 : f32
    %12 = vector.broadcast %cst_3 : f32 to vector<8x1xf32>
    %13 = arith.divf %11, %12 : vector<8x1xf32>
    %14 = vector.broadcast %13 : vector<8x1xf32> to vector<8x32xf32>
    %15 = arith.subf %1, %14 : vector<8x32xf32>
    %16 = arith.mulf %15, %15 : vector<8x32xf32>
    %cst_4 = arith.constant dense<0.000000e+00> : vector<8xf32>
    %17 = vector.multi_reduction <add>, %16, %cst_4 [1] : vector<8x32xf32> to vector<8xf32>
    %18 = vector.shape_cast %17 : vector<8xf32> to vector<8x1xf32>
    %cst_5 = arith.constant 3.200000e+01 : f32
    %19 = vector.broadcast %cst_5 : f32 to vector<8x1xf32>
    %20 = arith.divf %18, %19 : vector<8x1xf32>
    %cst_6 = arith.constant 9.99999974E-6 : f32
    %21 = vector.broadcast %cst_6 : f32 to vector<8x1xf32>
    %22 = arith.addf %20, %21 : vector<8x1xf32>
    %23 = math.rsqrt %22 : vector<8x1xf32>
    %24 = vector.broadcast %23 : vector<8x1xf32> to vector<8x32xf32>
    %25 = arith.mulf %15, %24 : vector<8x32xf32>
    %26 = vector.broadcast %3 : vector<1x32xf32> to vector<8x32xf32>
    %27 = arith.mulf %25, %26 : vector<8x32xf32>
    %28 = vector.broadcast %4 : vector<1x32xf32> to vector<8x32xf32>
    %29 = arith.addf %27, %28 : vector<8x32xf32>
    %30 = arith.truncf %29 : vector<8x32xf32> to vector<8x32xbf16>
    %c0_7 = arith.constant 0 : index
    %c0_8 = arith.constant 0 : index
    %31 = vector.load %arg2[%c0_7, %c0_8] : memref<32x32xbf16, #tpu.memory_space<vmem>>, vector<32x32xbf16>
    %cst_9 = arith.constant dense<0.000000e+00> : vector<8x32xf32>
    %32 = tpu.matmul %30, %31, %cst_9 {dimension_numbers = #tpu.dot_dimension_numbers<[1], [0], [0], [1], [0, 0, 1, 1], [], []>} : vector<8x32xbf16>, vector<32x32xbf16>, vector<8x32xf32> -> vector<8x32xf32>
    %cst_10 = arith.constant dense<0.000000e+00> : vector<8xf32>
    %33 = vector.multi_reduction <add>, %32, %cst_10 [1] : vector<8x32xf32> to vector<8xf32>
    %34 = vector.shape_cast %33 : vector<8xf32> to vector<8x1xf32>
    %cst_11 = arith.constant 3.200000e+01 : f32
    %35 = vector.broadcast %cst_11 : f32 to vector<8x1xf32>
    %36 = arith.divf %34, %35 : vector<8x1xf32>
    %37 = vector.broadcast %36 : vector<8x1xf32> to vector<8x32xf32>
    %38 = arith.subf %32, %37 : vector<8x32xf32>
    %39 = arith.mulf %38, %38 : vector<8x32xf32>
    %cst_12 = arith.constant dense<0.000000e+00> : vector<8xf32>
    %40 = vector.multi_reduction <add>, %39, %cst_12 [1] : vector<8x32xf32> to vector<8xf32>
    %41 = vector.shape_cast %40 : vector<8xf32> to vector<8x1xf32>
    %cst_13 = arith.constant 3.200000e+01 : f32
    %42 = vector.broadcast %cst_13 : f32 to vector<8x1xf32>
    %43 = arith.divf %41, %42 : vector<8x1xf32>
    %cst_14 = arith.constant 9.99999974E-6 : f32
    %44 = vector.broadcast %cst_14 : f32 to vector<8x1xf32>
    %45 = arith.addf %43, %44 : vector<8x1xf32>
    %46 = math.rsqrt %45 : vector<8x1xf32>
    %47 = vector.broadcast %46 : vector<8x1xf32> to vector<8x32xf32>
    %48 = arith.mulf %38, %47 : vector<8x32xf32>
    %49 = vector.broadcast %5 : vector<1x32xf32> to vector<8x32xf32>
    %50 = arith.mulf %48, %49 : vector<8x32xf32>
    %51 = vector.broadcast %6 : vector<1x32xf32> to vector<8x32xf32>
    %52 = arith.addf %50, %51 : vector<8x32xf32>
    %53 = arith.addf %1, %52 : vector<8x32xf32>
    %cst_15 = arith.constant dense<0.000000e+00> : vector<8xf32>
    %54 = vector.multi_reduction <add>, %53, %cst_15 [1] : vector<8x32xf32> to vector<8xf32>
    %55 = vector.shape_cast %54 : vector<8xf32> to vector<8x1xf32>
    %cst_16 = arith.constant 3.200000e+01 : f32
    %56 = vector.broadcast %cst_16 : f32 to vector<8x1xf32>
    %57 = arith.divf %55, %56 : vector<8x1xf32>
    %58 = vector.broadcast %57 : vector<8x1xf32> to vector<8x32xf32>
    %59 = arith.subf %53, %58 : vector<8x32xf32>
    %60 = arith.mulf %59, %59 : vector<8x32xf32>
    %cst_17 = arith.constant dense<0.000000e+00> : vector<8xf32>
    %61 = vector.multi_reduction <add>, %60, %cst_17 [1] : vector<8x32xf32> to vector<8xf32>
    %62 = vector.shape_cast %61 : vector<8xf32> to vector<8x1xf32>
    %cst_18 = arith.constant 3.200000e+01 : f32
    %63 = vector.broadcast %cst_18 : f32 to vector<8x1xf32>
    %64 = arith.divf %62, %63 : vector<8x1xf32>
    %cst_19 = arith.constant 9.99999974E-6 : f32
    %65 = vector.broadcast %cst_19 : f32 to vector<8x1xf32>
    %66 = arith.addf %64, %65 : vector<8x1xf32>
    %67 = math.rsqrt %66 : vector<8x1xf32>
    %68 = vector.broadcast %67 : vector<8x1xf32> to vector<8x32xf32>
    %69 = arith.mulf %59, %68 : vector<8x32xf32>
    %70 = vector.broadcast %7 : vector<1x32xf32> to vector<8x32xf32>
    %71 = arith.mulf %69, %70 : vector<8x32xf32>
    %72 = vector.broadcast %8 : vector<1x32xf32> to vector<8x32xf32>
    %73 = arith.addf %71, %72 : vector<8x32xf32>
    %74 = arith.truncf %73 : vector<8x32xf32> to vector<8x32xbf16>
    %c0_20 = arith.constant 0 : index
    %c0_21 = arith.constant 0 : index
    %75 = vector.load %arg5[%c0_20, %c0_21] : memref<32x128xbf16, #tpu.memory_space<vmem>>, vector<32x128xbf16>
    %cst_22 = arith.constant dense<0.000000e+00> : vector<8x128xf32>
    %76 = tpu.matmul %74, %75, %cst_22 {dimension_numbers = #tpu.dot_dimension_numbers<[1], [0], [0], [1], [0, 0, 1, 1], [], []>} : vector<8x32xbf16>, vector<32x128xbf16>, vector<8x128xf32> -> vector<8x128xf32>
    %c0_23 = arith.constant 0 : index
    %c0_24 = arith.constant 0 : index
    %77 = vector.load %arg4[%c0_23, %c0_24] : memref<1x128xf32, #tpu.memory_space<vmem>>, vector<1x128xf32>
    %78 = vector.broadcast %77 : vector<1x128xf32> to vector<8x128xf32>
    %79 = arith.addf %76, %78 : vector<8x128xf32>
    %cst_25 = arith.constant 5.000000e-01 : f32
    %80 = vector.broadcast %cst_25 : f32 to vector<8x128xf32>
    %81 = arith.mulf %80, %79 : vector<8x128xf32>
    %cst_26 = arith.constant 0.707106769 : f32
    %82 = vector.broadcast %cst_26 : f32 to vector<8x128xf32>
    %83 = arith.mulf %79, %82 : vector<8x128xf32>
    %cst_27 = arith.constant 0.000000e+00 : f32
    %84 = vector.broadcast %cst_27 : f32 to vector<8x128xf32>
    %85 = arith.cmpf olt, %83, %84 : vector<8x128xf32>
    %cst_28 = arith.constant -1.000000e+00 : f32
    %cst_29 = arith.constant 1.000000e+00 : f32
    %86 = vector.broadcast %cst_28 : f32 to vector<8x128xf32>
    %87 = vector.broadcast %cst_29 : f32 to vector<8x128xf32>
    %88 = arith.select %85, %86, %87 : vector<8x128xi1>, vector<8x128xf32>
    %89 = math.absf %83 : vector<8x128xf32>
    %cst_30 = arith.constant 0.327591091 : f32
    %90 = vector.broadcast %cst_30 : f32 to vector<8x128xf32>
    %91 = arith.mulf %90, %89 : vector<8x128xf32>
    %cst_31 = arith.constant 1.000000e+00 : f32
    %92 = vector.broadcast %cst_31 : f32 to vector<8x128xf32>
    %93 = arith.addf %92, %91 : vector<8x128xf32>
    %94 = tpu.reciprocal %93 {approx = true} : vector<8x128xf32> -> vector<8x128xf32>
    %cst_32 = arith.constant 1.06140542 : f32
    %95 = vector.broadcast %cst_32 : f32 to vector<8x128xf32>
    %96 = arith.mulf %95, %94 : vector<8x128xf32>
    %cst_33 = arith.constant -1.45315206 : f32
    %97 = vector.broadcast %cst_33 : f32 to vector<8x128xf32>
    %98 = arith.addf %96, %97 : vector<8x128xf32>
    %99 = arith.mulf %98, %94 : vector<8x128xf32>
    %cst_34 = arith.constant 1.42141378 : f32
    %100 = vector.broadcast %cst_34 : f32 to vector<8x128xf32>
    %101 = arith.addf %99, %100 : vector<8x128xf32>
    %102 = arith.mulf %101, %94 : vector<8x128xf32>
    %cst_35 = arith.constant -0.284496725 : f32
    %103 = vector.broadcast %cst_35 : f32 to vector<8x128xf32>
    %104 = arith.addf %102, %103 : vector<8x128xf32>
    %105 = arith.mulf %104, %94 : vector<8x128xf32>
    %cst_36 = arith.constant 0.254829586 : f32
    %106 = vector.broadcast %cst_36 : f32 to vector<8x128xf32>
    %107 = arith.addf %105, %106 : vector<8x128xf32>
    %108 = arith.mulf %107, %94 : vector<8x128xf32>
    %cst_37 = arith.constant 0.000000e+00 : f32
    %109 = vector.broadcast %cst_37 : f32 to vector<8x128xf32>
    %110 = arith.subf %109, %89 : vector<8x128xf32>
    %111 = arith.mulf %110, %89 : vector<8x128xf32>
    %112 = math.exp %111 : vector<8x128xf32>
    %113 = arith.mulf %108, %112 : vector<8x128xf32>
    %cst_38 = arith.constant 1.000000e+00 : f32
    %114 = vector.broadcast %cst_38 : f32 to vector<8x128xf32>
    %115 = arith.subf %114, %113 : vector<8x128xf32>
    %116 = arith.mulf %88, %115 : vector<8x128xf32>
    %cst_39 = arith.constant 1.000000e+00 : f32
    %117 = vector.broadcast %cst_39 : f32 to vector<8x128xf32>
    %118 = arith.addf %117, %116 : vector<8x128xf32>
    %119 = arith.mulf %81, %118 : vector<8x128xf32>
    %120 = arith.truncf %119 : vector<8x128xf32> to vector<8x128xbf16>
    %c0_40 = arith.constant 0 : index
    %c0_41 = arith.constant 0 : index
    %121 = vector.load %arg6[%c0_40, %c0_41] : memref<128x32xbf16, #tpu.memory_space<vmem>>, vector<128x32xbf16>
    %cst_42 = arith.constant dense<0.000000e+00> : vector<8x32xf32>
    %122 = tpu.matmul %120, %121, %cst_42 {dimension_numbers = #tpu.dot_dimension_numbers<[1], [0], [0], [1], [0, 0, 1, 1], [], []>} : vector<8x128xbf16>, vector<128x32xbf16>, vector<8x32xf32> -> vector<8x32xf32>
    %123 = vector.broadcast %9 : vector<1x32xf32> to vector<8x32xf32>
    %124 = arith.addf %122, %123 : vector<8x32xf32>
    %125 = arith.addf %53, %124 : vector<8x32xf32>
    %126 = arith.truncf %125 : vector<8x32xf32> to vector<8x32xbf16>
    %c0_43 = arith.constant 0 : index
    %c0_44 = arith.constant 0 : index
    %127 = vector.load %arg7[%c0_43, %c0_44] : memref<8x32xbf16, #tpu.memory_space<vmem>>, vector<8x32xbf16>
    tpu.vector_store %arg7[%c0_43, %c0_44], %126 {strides = array<i32>} : memref<8x32xbf16, #tpu.memory_space<vmem>>, vector<8x32xbf16>,
    return
  }
  func.func @transform_0(%arg0: i32) -> (i32, i32) {
    %c0_i32 = arith.constant 0 : i32
    %c0_i32_0 = arith.constant 0 : i32
    return %arg0, %c0_i32 : i32, i32
  }
  func.func @transform_1(%arg0: i32) -> (i32, i32) {
    %c0_i32 = arith.constant 0 : i32
    %c0_i32_0 = arith.constant 0 : i32
    %c0_i32_1 = arith.constant 0 : i32
    return %c0_i32, %c0_i32_0 : i32, i32
  }
  func.func @transform_2(%arg0: i32) -> (i32, i32) {
    %c0_i32 = arith.constant 0 : i32
    %c0_i32_0 = arith.constant 0 : i32
    %c0_i32_1 = arith.constant 0 : i32
    return %c0_i32, %c0_i32_0 : i32, i32
  }
  func.func @transform_3(%arg0: i32) -> (i32, i32) {
    %c0_i32 = arith.constant 0 : i32
    %c0_i32_0 = arith.constant 0 : i32
    %c0_i32_1 = arith.constant 0 : i32
    return %c0_i32, %c0_i32_0 : i32, i32
  }
  func.func @transform_4(%arg0: i32) -> (i32, i32) {
    %c0_i32 = arith.constant 0 : i32
    %c0_i32_0 = arith.constant 0 : i32
    %c0_i32_1 = arith.constant 0 : i32
    return %c0_i32, %c0_i32_0 : i32, i32
  }
  func.func @transform_5(%arg0: i32) -> (i32, i32) {
    %c0_i32 = arith.constant 0 : i32
    %c0_i32_0 = arith.constant 0 : i32
    %c0_i32_1 = arith.constant 0 : i32
    return %c0_i32, %c0_i32_0 : i32, i32
  }
  func.func @transform_6(%arg0: i32) -> (i32, i32) {
    %c0_i32 = arith.constant 0 : i32
    %c0_i32_0 = arith.constant 0 : i32
    return %arg0, %c0_i32 : i32, i32
  }
}

</mosaic_0001>

<llo_original>
// kernel: tpu_custom_call.1
$region0: #{tpu_custom_call.1}
  #allocation0 [shape = 'u32[]', space=smem, size = 0x4, offset = 0x4, fixed_abs, tag = 'smem constant byte address 0x4 - core index']
  #allocation1 [shape = 'u32[144,128]{1,0:T(1,128)}', space=vmem, size = 0x12000, scoped, tag = 'internal scratch']
  %s0 = inlined_call_operand.hbm [shape: f32[16,128], index: 0, kind: input, shape index: {}]
  %s1 = inlined_call_operand.hbm [shape: f32[8,128], index: 1, kind: input, shape index: {}]
  %s2 = inlined_call_operand.hbm [shape: f32[16,128], index: 2, kind: output, shape index: {}]
  %s3 = sld [smem:[#allocation0]]
  $region49: #{tpu_custom_call.1} parent=0
    _
  %s5 = ssub.s32 1, %s3
  %s6 = scalar_select 0, %s5, %s3
  $region1: #{tpu_custom_call.1} parent=0
    #allocation2 [shape = 'u8[8192]{0}', space=vmem, size = 0x2000, scoped, tag = 'input window, operand 0']
    #allocation3 [shape = 's32[2]{0}', space=sflag, size = 0x8, scoped, tag = 'scoped memory for tpu_custom_call.1']
    #allocation4 [shape = 's32[2]{0}', space=sflag, size = 0x8, scoped, tag = 'scoped memory for tpu_custom_call.1']
    #allocation5 [shape = 'u8[4096]{0}', space=vmem, size = 0x1000, scoped, tag = 'input window, operand 1, single buffered']
    #allocation6 [shape = 's32[1]{0}', space=sflag, size = 0x4, scoped, tag = 'scoped memory for tpu_custom_call.1']
    #allocation7 [shape = 'u8[8192]{0}', space=vmem, size = 0x2000, scoped, tag = 'output window, operand 0']
    %7 = vsyncpa [#allocation3], 0
    %s8 = scalar_lea.sflag [#allocation3], 1
    %9 = vsyncpa %s8, 0
    %10 = vsyncpa [#allocation6], 0
    %11 = vsyncpa [#allocation4], 0
    %s12 = scalar_lea.sflag [#allocation4], 1
    %13 = vsyncpa %s12, 0
    loop: start=0, step=1, limit=4
    $region2: #{tpu_custom_call.1} parent=1 // loop_pre_header
      _
    $region3: #{tpu_custom_call.1} parent=1 // loop_header
      %s15 = sphi 0, %s19
      %p16 = scmp.ge.s32.totalorder %s15, 4
      %s25 = sphi 0, %s27
      %s28 = sphi 0, %s25
      %s29 = sphi 0, %s28
      %s45 = sphi 0, %s29
      %s49 = sphi 0, %s49
      %s51 = sphi 0, %s49
      %s52 = sphi 0, %s51
      %s66 = sphi 0, %s52
      %s72 = sphi 0, %s74
      %s75 = sphi 0, %s72
      %s76 = sphi 0, %s75
      %s92 = sphi 0, %s76
    $region4: #{tpu_custom_call.1} parent=1 // loop_header_branch
      %18 = sbr.rel (%p16) target = $region8
    $region5: #{tpu_custom_call.1} parent=1 // loop_body
      %s20 = ssub.s32 %s15, 1
      %s21 = ssub.s32 %s15, 2
      %s22 = sadd.s32 %s15, 1
      %s23 = ssub.s32 %s15, %s22
      %p24 = scmp.eq.s32.totalorder %s23, 0
      %s26 = sadd.s32 %s25, 1
      %s27 = scalar_select %p24, %s25, %s26
      %p30 = pneg %p24
      %p31 = scmp.eq.s32.totalorder %s15, 1
      %p32 = por %p30, %p31
      %p33 = scmp.ne.s32.totalorder %s25, %s28
      %p34 = scmp.eq.s32.totalorder %s15, 0
      %p35 = por %p33, %p34
      %p36 = scmp.ne.s32.totalorder %s25, %s28
      %p37 = scmp.eq.s32.totalorder %s20, 1
      %p38 = por %p36, %p37
      %p39 = scmp.ne.s32.totalorder %s28, %s29
      %p40 = scmp.eq.s32.totalorder %s20, 0
      %p41 = por %p39, %p40
      %p42 = scmp.ne.s32.totalorder %s28, %s29
      %p43 = scmp.eq.s32.totalorder %s21, 1
      %p44 = por %p42, %p43
      %p46 = scmp.ne.s32.totalorder %s29, %s45
      %p47 = scmp.eq.s32.totalorder %s21, 0
      %p48 = por %p46, %p47
      %s50 = sadd.s32 %s49, 1
      %p53 = scmp.eq.s32.totalorder %s15, 1
      %p54 = scmp.ne.s32.totalorder %s49, %s51
      %p55 = scmp.eq.s32.totalorder %s15, 0
      %p56 = por %p54, %p55
      %p57 = scmp.ne.s32.totalorder %s49, %s51
      %p58 = scmp.eq.s32.totalorder %s20, 1
      %p59 = por %p57, %p58
      %p60 = scmp.ne.s32.totalorder %s51, %s52
      %p61 = scmp.eq.s32.totalorder %s20, 0
      %p62 = por %p60, %p61
      %p63 = scmp.ne.s32.totalorder %s51, %s52
      %p64 = scmp.eq.s32.totalorder %s21, 1
      %p65 = por %p63, %p64
      %p67 = scmp.ne.s32.totalorder %s52, %s66
      %p68 = scmp.eq.s32.totalorder %s21, 0
      %p69 = por %p67, %p68
      %s70 = ssub.s32 %s15, %s22
      %p71 = scmp.eq.s32.totalorder %s70, 0
      %s73 = sadd.s32 %s72, 1
      %s74 = scalar_select %p71, %s72, %s73
      %p77 = pneg %p71
      %p78 = scmp.eq.s32.totalorder %s15, 1
      %p79 = por %p77, %p78
      %p80 = scmp.ne.s32.totalorder %s72, %s75
      %p81 = scmp.eq.s32.totalorder %s15, 0
      %p82 = por %p80, %p81
      %p83 = scmp.ne.s32.totalorder %s72, %s75
      %p84 = scmp.eq.s32.totalorder %s20, 1
      %p85 = por %p83, %p84
      %p86 = scmp.ne.s32.totalorder %s75, %s76
      %p87 = scmp.eq.s32.totalorder %s20, 0
      %p88 = por %p86, %p87
      %p89 = scmp.ne.s32.totalorder %s75, %s76
      %p90 = scmp.eq.s32.totalorder %s21, 1
      %p91 = por %p89, %p90
      %p93 = scmp.ne.s32.totalorder %s76, %s92
      %p94 = scmp.eq.s32.totalorder %s21, 0
      %p95 = por %p93, %p94
      %p96 = scmp.le.s32.totalorder 1, %s15
      %p97 = scmp.lt.s32.totalorder %s15, 3
      %p98 = pnand %p96, %p97
      %p99 = pneg %p98
      // Predicated region
      $region9: #{tpu_custom_call.1} parent=5 // pred_check
        _
      $region10: #{tpu_custom_call.1} parent=5 // pred_check_branch
        %101 = sbr.rel (%p98) target = $region12
      $region11: #{tpu_custom_call.1} parent=5 // pred_region
        %s102 = ssub.s32 %s15, 1
        // Predicated region
        $region13: #{tpu_custom_call.1} parent=11 // pred_check
          %p103 = pneg %p62
        $region14: #{tpu_custom_call.1} parent=11 // pred_check_branch
          %105 = sbr.rel (%p103) target = $region16
        $region15: #{tpu_custom_call.1} parent=11 // pred_region
          %s107 = ssub.s32 128, 128
          %108 = vsyncadd [#allocation6], %s107
          %s110 = sshll.u32 [#allocation5], 4
          %s111 = int_to_ptr.vmem [resolvable:$true] %s110
          %113 = dma.hbm_to_vmem [thread:$0]  %s1, 128, %s111, [#allocation6]
        $region16: #{tpu_custom_call.1} parent=11 // pred_fallthru
          _
      $region12: #{tpu_custom_call.1} parent=5 // pred_fallthru
        _
      %p114 = scmp.lt.s32.totalorder %s15, 2
      // Predicated region
      $region17: #{tpu_custom_call.1} parent=5 // pred_check
        %p115 = pneg %p114
      $region18: #{tpu_custom_call.1} parent=5 // pred_check_branch
        %117 = sbr.rel (%p115) target = $region20
      $region19: #{tpu_custom_call.1} parent=5 // pred_region
        // Predicated region
        $region21: #{tpu_custom_call.1} parent=19 // pred_check
          %p118 = pneg %p35
        $region22: #{tpu_custom_call.1} parent=19 // pred_check_branch
          %120 = sbr.rel (%p118) target = $region24
        $region23: #{tpu_custom_call.1} parent=19 // pred_region
          %s121 = sand.u32 %s25, 1
          %s122 = scalar_lea.sflag [#allocation3], %s121
          %s123 = sand.u32 %s25, 1
          %s124 = smul.addr %s123, 8
          %s125 = scalar_lea.vmem [#allocation2], %s124
          %s127 = ssub.s32 128, 128
          %128 = vsyncadd %s122, %s127
          %s129 = smul.addr %s15, 128
          %s130 = scalar_lea.hbm %s0, %s129
          %s132 = sshll.u32 %s125, 4
          %s133 = int_to_ptr.vmem [resolvable:$true] %s132
          %135 = dma.hbm_to_vmem [thread:$0]  %s130, 128, %s133, %s122
        $region24: #{tpu_custom_call.1} parent=19 // pred_fallthru
          _
      $region20: #{tpu_custom_call.1} parent=5 // pred_fallthru
        _
      %p136 = scmp.le.s32.totalorder 1, %s15
      %p137 = scmp.lt.s32.totalorder %s15, 3
      %p138 = pnand %p136, %p137
      %p139 = pneg %p138
      // Predicated region
      $region25: #{tpu_custom_call.1} parent=5 // pred_check
        _
      $region26: #{tpu_custom_call.1} parent=5 // pred_check_branch
        %141 = sbr.rel (%p138) target = $region28
      $region27: #{tpu_custom_call.1} parent=5 // pred_region
        %s142 = ssub.s32 %s15, 1
        %s143 = sand.u32 %s28, 1
        %s144 = scalar_lea.sflag [#allocation3], %s143
        %s145 = sand.u32 %s28, 1
        %s146 = smul.addr %s145, 8
        %s147 = scalar_lea.vmem [#allocation2], %s146
        // Predicated region
        $region29: #{tpu_custom_call.1} parent=27 // pred_check
          %p148 = pneg %p41
        $region30: #{tpu_custom_call.1} parent=27 // pred_check_branch
          %150 = sbr.rel (%p148) target = $region32
        $region31: #{tpu_custom_call.1} parent=27 // pred_region
          %151 = dma.done %s144, 128
        $region32: #{tpu_custom_call.1} parent=27 // pred_fallthru
          _
        // Predicated region
        $region33: #{tpu_custom_call.1} parent=27 // pred_check
          %p152 = pneg %p62
        $region34: #{tpu_custom_call.1} parent=27 // pred_check_branch
          %154 = sbr.rel (%p152) target = $region36
        $region35: #{tpu_custom_call.1} parent=27 // pred_region
          %155 = dma.done [#allocation6], 128
        $region36: #{tpu_custom_call.1} parent=27 // pred_fallthru
          _
        %s156 = sand.u32 %s28, 1
        %s157 = scalar_lea.sflag [#allocation3], %s156
        %s158 = sand.u32 %s28, 1
        %s159 = smul.addr %s158, 8
        %s160 = scalar_lea.vmem [#allocation2], %s159
        %p161 = pneg %p41
        %p162 = pneg %p38
        %p163 = pneg %p62
        %p164 = pneg %p59
        %p165 = pneg %p88
        %p166 = pneg %p85
        %s167 = sand.u32 %s75, 1
        %s168 = scalar_lea.sflag [#allocation4], %s167
        %s169 = sand.u32 %s75, 1
        %s170 = smul.addr %s169, 8
        %s171 = scalar_lea.vmem [#allocation7], %s170
        %v172 = vld [vmem:[%s147] sm:$0xff]
        %v173 = vld [vmem:[#allocation5] sm:$0xff]
        %v174 = vadd.f32 %v172, %v173
        %175 = vst [vmem:[%s171] sm:$0xff] %v174
        %s176 = sand.u32 %s75, 1
        %s177 = scalar_lea.sflag [#allocation4], %s176
        %s178 = sand.u32 %s75, 1
        %s179 = smul.addr %s178, 8
        %s180 = scalar_lea.vmem [#allocation7], %s179
        // Predicated region
        $region37: #{tpu_custom_call.1} parent=27 // pred_check
          %p181 = pneg %p85
        $region38: #{tpu_custom_call.1} parent=27 // pred_check_branch
          %183 = sbr.rel (%p181) target = $region40
        $region39: #{tpu_custom_call.1} parent=27 // pred_region
          %s185 = ssub.s32 128, 128
          %186 = vsyncadd %s177, %s185
          %s187 = smul.addr %s20, 128
          %s188 = scalar_lea.hbm %s2, %s187
          %s190 = sshll.u32 %s180, 4
          %s191 = int_to_ptr.vmem [resolvable:$true] %s190
          %193 = dma.vmem_to_hbm [thread:$0]  %s191, 128, %s188, %s177
        $region40: #{tpu_custom_call.1} parent=27 // pred_fallthru
          _
      $region28: #{tpu_custom_call.1} parent=5 // pred_fallthru
        _
      %p194 = scmp.le.s32.totalorder 2, %s15
      // Predicated region
      $region41: #{tpu_custom_call.1} parent=5 // pred_check
        %p195 = pneg %p194
      $region42: #{tpu_custom_call.1} parent=5 // pred_check_branch
        %197 = sbr.rel (%p195) target = $region44
      $region43: #{tpu_custom_call.1} parent=5 // pred_region
        %s198 = ssub.s32 %s15, 2
        // Predicated region
        $region45: #{tpu_custom_call.1} parent=43 // pred_check
          %p199 = pneg %p91
        $region46: #{tpu_custom_call.1} parent=43 // pred_check_branch
          %201 = sbr.rel (%p199) target = $region48
        $region47: #{tpu_custom_call.1} parent=43 // pred_region
          %s202 = sand.u32 %s76, 1
          %s203 = scalar_lea.sflag [#allocation4], %s202
          %s204 = sand.u32 %s76, 1
          %s205 = smul.addr %s204, 8
          %s206 = scalar_lea.vmem [#allocation7], %s205
          %207 = dma.done %s203, 128
        $region48: #{tpu_custom_call.1} parent=43 // pred_fallthru
          _
      $region44: #{tpu_custom_call.1} parent=5 // pred_fallthru
        _
    $region6: #{tpu_custom_call.1} parent=1 // loop_footer
      %s19 = sadd.s32 1, %s15
    $region7: #{tpu_custom_call.1} parent=1 // loop_footer_branch
      %14 = sbr.rel target = $region3
    $region8: #{tpu_custom_call.1} parent=1 // loop_exit
      _
    %208 = vsyncpa [#allocation3], 1
    %s209 = scalar_lea.sflag [#allocation3], 1
    %210 = vsyncpa %s209, 1
    %211 = vsyncpa [#allocation6], 1
    %212 = vsyncpa [#allocation4], 1
    %s213 = scalar_lea.sflag [#allocation4], 1
    %214 = vsyncpa %s213, 1

// kernel: _lambda_.7
$region0: #{_lambda_.7}
  #allocation0 [shape = 'u32[]', space=smem, size = 0x4, offset = 0x4, fixed_abs, tag = 'smem constant byte address 0x4 - core index']
  #allocation1 [shape = 'u32[144,128]{1,0:T(1,128)}', space=vmem, size = 0x12000, scoped, tag = 'internal scratch']
  #allocation2 [shape = 'bf16[8,32]{1,0:T(8,128)(2,1)}', space=vmem, size = 0x800, scoped, tag = 'scratch operand']
  %s0 = inlined_call_operand.vmem [shape: bf16[16,32], index: 0, kind: input, shape index: {}]
  %s1 = inlined_call_operand.vmem [shape: f32[2,32], index: 1, kind: input, shape index: {}]
  %s2 = inlined_call_operand.vmem [shape: bf16[32,128], index: 2, kind: input, shape index: {}]
  %s3 = inlined_call_operand.vmem [shape: f32[16,128], index: 3, kind: output, shape index: {}]
  %s4 = sld [smem:[#allocation0]]
  $region49: #{_lambda_.7} parent=0
    _
  %s6 = ssub.s32 1, %s4
  %s7 = scalar_select 0, %s6, %s4
  loop: start=0, step=1, limit=4
  $region2: #{_lambda_.7} parent=0 // loop_pre_header
    _
  $region3: #{_lambda_.7} parent=0 // loop_header
    %s9 = sphi 0, %s13
    %p10 = scmp.ge.s32.totalorder %s9, 4
    %s16 = sphi 0, %s28
    %s17 = sphi 0, %s24
    %s18 = sphi 0, %s16
    %s19 = sphi 0, %s17
    %s20 = sphi 0, %s18
    %s21 = sphi 0, %s19
    %s31 = sphi 0, %s33
    %s34 = sphi 0, %s31
    %s35 = sphi 0, %s34
    %s51 = sphi 0, %s35
    %s55 = sphi 0, %s55
    %s57 = sphi 0, %s55
    %s58 = sphi 0, %s57
    %s72 = sphi 0, %s58
    %s78 = sphi 0, %s80
    %s81 = sphi 0, %s78
    %s82 = sphi 0, %s81
    %s98 = sphi 0, %s82
    %s106 = sphi 0, %s108
    %s109 = sphi 0, %s106
    %s110 = sphi 0, %s109
    %s126 = sphi 0, %s110
  $region4: #{_lambda_.7} parent=0 // loop_header_branch
    %12 = sbr.rel (%p10) target = $region8
  $region5: #{_lambda_.7} parent=0 // loop_body
    %s14 = ssub.s32 %s9, 1
    %s15 = ssub.s32 %s9, 2
    %s22 = sadd.s32 1, %s17
    %p23 = scmp.ge.s32.totalorder %s22, 1
    %s24 = scalar_select %p23, 0, %s22
    %s25 = sadd.s32 1, %s16
    %s26 = scalar_select %p23, %s25, %s16
    %p27 = scmp.ge.s32.totalorder %s26, 2
    %s28 = scalar_select %p27, 0, %s26
    %s29 = ssub.s32 %s16, %s28
    %p30 = scmp.eq.s32.totalorder %s29, 0
    %s32 = sadd.s32 %s31, 1
    %s33 = scalar_select %p30, %s31, %s32
    %p36 = pneg %p30
    %p37 = scmp.eq.s32.totalorder %s9, 1
    %p38 = por %p36, %p37
    %p39 = scmp.ne.s32.totalorder %s31, %s34
    %p40 = scmp.eq.s32.totalorder %s9, 0
    %p41 = por %p39, %p40
    %p42 = scmp.ne.s32.totalorder %s31, %s34
    %p43 = scmp.eq.s32.totalorder %s14, 1
    %p44 = por %p42, %p43
    %p45 = scmp.ne.s32.totalorder %s34, %s35
    %p46 = scmp.eq.s32.totalorder %s14, 0
    %p47 = por %p45, %p46
    %p48 = scmp.ne.s32.totalorder %s34, %s35
    %p49 = scmp.eq.s32.totalorder %s15, 1
    %p50 = por %p48, %p49
    %p52 = scmp.ne.s32.totalorder %s35, %s51
    %p53 = scmp.eq.s32.totalorder %s15, 0
    %p54 = por %p52, %p53
    %s56 = sadd.s32 %s55, 1
    %p59 = scmp.eq.s32.totalorder %s9, 1
    %p60 = scmp.ne.s32.totalorder %s55, %s57
    %p61 = scmp.eq.s32.totalorder %s9, 0
    %p62 = por %p60, %p61
    %p63 = scmp.ne.s32.totalorder %s55, %s57
    %p64 = scmp.eq.s32.totalorder %s14, 1
    %p65 = por %p63, %p64
    %p66 = scmp.ne.s32.totalorder %s57, %s58
    %p67 = scmp.eq.s32.totalorder %s14, 0
    %p68 = por %p66, %p67
    %p69 = scmp.ne.s32.totalorder %s57, %s58
    %p70 = scmp.eq.s32.totalorder %s15, 1
    %p71 = por %p69, %p70
    %p73 = scmp.ne.s32.totalorder %s58, %s72
    %p74 = scmp.eq.s32.totalorder %s15, 0
    %p75 = por %p73, %p74
    %s76 = ssub.s32 %s17, %s24
    %p77 = scmp.eq.s32.totalorder %s76, 0
    %s79 = sadd.s32 %s78, 1
    %s80 = scalar_select %p77, %s78, %s79
    %p83 = pneg %p77
    %p84 = scmp.eq.s32.totalorder %s9, 1
    %p85 = por %p83, %p84
    %p86 = scmp.ne.s32.totalorder %s78, %s81
    %p87 = scmp.eq.s32.totalorder %s9, 0
    %p88 = por %p86, %p87
    %p89 = scmp.ne.s32.totalorder %s78, %s81
    %p90 = scmp.eq.s32.totalorder %s14, 1
    %p91 = por %p89, %p90
    %p92 = scmp.ne.s32.totalorder %s81, %s82
    %p93 = scmp.eq.s32.totalorder %s14, 0
    %p94 = por %p92, %p93
    %p95 = scmp.ne.s32.totalorder %s81, %s82
    %p96 = scmp.eq.s32.totalorder %s15, 1
    %p97 = por %p95, %p96
    %p99 = scmp.ne.s32.totalorder %s82, %s98
    %p100 = scmp.eq.s32.totalorder %s15, 0
    %p101 = por %p99, %p100
    %s102 = ssub.s32 %s16, %s28
    %s103 = ssub.s32 %s17, %s24
    %s104 = sor.u32 %s102, %s103
    %p105 = scmp.eq.s32.totalorder %s104, 0
    %s107 = sadd.s32 %s106, 1
    %s108 = scalar_select %p105, %s106, %s107
    %p111 = pneg %p105
    %p112 = scmp.eq.s32.totalorder %s9, 1
    %p113 = por %p111, %p112
    %p114 = scmp.ne.s32.totalorder %s106, %s109
    %p115 = scmp.eq.s32.totalorder %s9, 0
    %p116 = por %p114, %p115
    %p117 = scmp.ne.s32.totalorder %s106, %s109
    %p118 = scmp.eq.s32.totalorder %s14, 1
    %p119 = por %p117, %p118
    %p120 = scmp.ne.s32.totalorder %s109, %s110
    %p121 = scmp.eq.s32.totalorder %s14, 0
    %p122 = por %p120, %p121
    %p123 = scmp.ne.s32.totalorder %s109, %s110
    %p124 = scmp.eq.s32.totalorder %s15, 1
    %p125 = por %p123, %p124
    %p127 = scmp.ne.s32.totalorder %s110, %s126
    %p128 = scmp.eq.s32.totalorder %s15, 0
    %p129 = por %p127, %p128
    %p130 = scmp.le.s32.totalorder 1, %s9
    %p131 = scmp.lt.s32.totalorder %s9, 3
    %p132 = pnand %p130, %p131
    %p133 = pneg %p132
    // Predicated region
    $region9: #{_lambda_.7} parent=5 // pred_check
      _
    $region10: #{_lambda_.7} parent=5 // pred_check_branch
      %135 = sbr.rel (%p132) target = $region12
    $region11: #{_lambda_.7} parent=5 // pred_region
      %s136 = ssub.s32 %s9, 1
      // Predicated region
      $region13: #{_lambda_.7} parent=11 // pred_check
        %p137 = pneg %p68
      $region14: #{_lambda_.7} parent=11 // pred_check_branch
        %139 = sbr.rel (%p137) target = $region16
      $region15: #{_lambda_.7} parent=11 // pred_region
        _
      $region16: #{_lambda_.7} parent=11 // pred_fallthru
        _
      // Predicated region
      $region17: #{_lambda_.7} parent=11 // pred_check
        %p140 = pneg %p94
      $region18: #{_lambda_.7} parent=11 // pred_check_branch
        %142 = sbr.rel (%p140) target = $region20
      $region19: #{_lambda_.7} parent=11 // pred_region
        %p143 = scmp.lt.s32.totalorder %s19, 0
        %s144 = scalar_select %p143, %s19, 0
        %s145 = smul.addr %s144, 4
        %s146 = scalar_lea.vmem %s2, %s145
      $region20: #{_lambda_.7} parent=11 // pred_fallthru
        _
    $region12: #{_lambda_.7} parent=5 // pred_fallthru
      _
    %p147 = scmp.lt.s32.totalorder %s9, 2
    // Predicated region
    $region21: #{_lambda_.7} parent=5 // pred_check
      %p148 = pneg %p147
    $region22: #{_lambda_.7} parent=5 // pred_check_branch
      %150 = sbr.rel (%p148) target = $region24
    $region23: #{_lambda_.7} parent=5 // pred_region
      // Predicated region
      $region25: #{_lambda_.7} parent=23 // pred_check
        %p151 = pneg %p41
      $region26: #{_lambda_.7} parent=23 // pred_check_branch
        %153 = sbr.rel (%p151) target = $region28
      $region27: #{_lambda_.7} parent=23 // pred_region
        %p154 = scmp.lt.s32.totalorder %s16, 1
        %s155 = scalar_select %p154, %s16, 1
        %s156 = smul.addr %s155, 4
        %s157 = scalar_lea.vmem %s0, %s156
      $region28: #{_lambda_.7} parent=23 // pred_fallthru
        _
    $region24: #{_lambda_.7} parent=5 // pred_fallthru
      _
    %p158 = scmp.le.s32.totalorder 1, %s9
    %p159 = scmp.lt.s32.totalorder %s9, 3
    %p160 = pnand %p158, %p159
    %p161 = pneg %p160
    // Predicated region
    $region29: #{_lambda_.7} parent=5 // pred_check
      _
    $region30: #{_lambda_.7} parent=5 // pred_check_branch
      %163 = sbr.rel (%p160) target = $region32
    $region31: #{_lambda_.7} parent=5 // pred_region
      %s164 = ssub.s32 %s9, 1
      %p165 = scmp.lt.s32.totalorder %s18, 1
      %s166 = scalar_select %p165, %s18, 1
      %s167 = smul.addr %s166, 4
      %s168 = scalar_lea.vmem %s0, %s167
      %p169 = pneg %p47
      %p170 = pneg %p44
      %p171 = pneg %p68
      %p172 = pneg %p65
      %p173 = scmp.lt.s32.totalorder %s19, 0
      %s174 = scalar_select %p173, %s19, 0
      %s175 = smul.addr %s174, 4
      %s176 = scalar_lea.vmem %s2, %s175
      %p177 = pneg %p94
      %p178 = pneg %p91
      %p179 = pneg %p122
      %p180 = pneg %p119
      %p181 = scmp.lt.s32.totalorder %s18, 1
      %s182 = scalar_select %p181, %s18, 1
      %p183 = scmp.lt.s32.totalorder %s19, 0
      %s184 = scalar_select %p183, %s19, 0
      %s185 = sadd.s32 %s184, %s182
      %s186 = smul.addr %s185, 8
      %s187 = scalar_lea.vmem %s3, %s186
      %p188 = scmp.lt.s32.totalorder %s18, 1
      %s189 = scalar_select %p188, %s18, 1
      %s190 = smul.addr %s189, 4
      %s191 = scalar_lea.vmem %s0, %s190
      %p192 = scmp.lt.s32.totalorder %s19, 0
      %s193 = scalar_select %p192, %s19, 0
      %s194 = smul.addr %s193, 4
      %s195 = scalar_lea.vmem %s2, %s194
      %p196 = scmp.lt.s32.totalorder %s18, 1
      %s197 = scalar_select %p196, %s18, 1
      %p198 = scmp.lt.s32.totalorder %s19, 0
      %s199 = scalar_select %p198, %s19, 0
      %s200 = sadd.s32 %s199, %s197
      %s201 = smul.addr %s200, 8
      %s202 = scalar_lea.vmem %s3, %s201
      %p204 = scmp.eq.s32.totalorder %s19, 0
      // Predicated region
      $region33: #{_lambda_.7} parent=31 // pred_check
        %p205 = pneg %p204
      $region34: #{_lambda_.7} parent=31 // pred_check_branch
        %207 = sbr.rel (%p205) target = $region36
      $region35: #{_lambda_.7} parent=31 // pred_region
        %v208 = vld [vmem:[%s191] sm:$0xf]
        %v209 = vunpack.c.l.bf16 %v208
        %v210 = vld [vmem:[%s1] sm:$0x1]
        %v211 = vld [vmem:[%s1 + $0x1] sm:$0x1]
        %vm212 = vcmask 261120
        %v213 = vsel %vm212, %v209, 0.0
        %214 = vadd.xlane.f32.xlu0 %v213
        %v215 = vpop.xlane.xlu0 %214
        %v216 = vrcp.pop 32.0
        %v217 = vmul.f32 %v215, %v216
        %v218 = vsub.f32 %v209, %v217
        %v219 = vmul.f32 %v218, %v218
        %v220 = vsel %vm212, %v219, 0.0
        %221 = vadd.xlane.f32.xlu0 %v220
        %v222 = vpop.xlane.xlu0 %221
        %v223 = vmul.f32 %v222, %v216
        %v224 = vadd.f32 %v223, 1e-05
        %v225 = vrsqrt.pop %v224
        %v226 = vmul.f32 %v218, %v225
        %v227 = vlaneseq
        %v228 = vshrl.u32 %v227, 7
        %v229 = vsub.s32 0, %v228
        %v230 = vrot.slane %v210, %v229
        %v231 = vmul.f32 %v226, %v230
        %v232 = vlaneseq
        %v233 = vshrl.u32 %v232, 7
        %v234 = vsub.s32 0, %v233
        %v235 = vrot.slane %v211, %v234
        %v236 = vadd.f32 %v231, %v235
        %v237 = vpack.c.bf16 %v236, %v236
        %vm238 = vcmask 257024
        %239 = vst.msk [vmem:[#allocation2] sm:$0xf] %vm238, %v237
      $region36: #{_lambda_.7} parent=31 // pred_fallthru
        _
      %v240 = vld [vmem:[#allocation2] sm:$0xf]
      %v241 = vld [vmem:[%s195] sm:$0xf]
      %v242 = vld [vmem:[%s195 + $0x4] sm:$0xf]
      %v243 = vld [vmem:[%s195 + $0x8] sm:$0xf]
      %v244 = vld [vmem:[%s195 + $0xc] sm:$0xf]
      %v249 = vunpack.c.l.b16 %v241
      %v250 = vunpack.c.l.b16 %v242
      %v251 = vunpack.c.l.b16 %v243
      %v252 = vunpack.c.l.b16 %v244
      %v253 = vpack.c.b16 %v250, %v249
      %v254 = vpack.c.b16 %v252, %v251
      %vm257 = vcmask 261120
      %v259 = vsel %vm257, %v240, 0
      %261 = vmatprep.subr.bf16.mxu0 0
      %262 = vmatpush1.bf16.msra.mxu0 %v253
      %263 = vmatprep.subr.bf16.mxu0 0
      %264 = vmatpush1.bf16.msra.mxu0 %v254
      %265 = vmatprep.subr.bf16.mxu0 0
      %266 = vmatpush1.bf16.msra.mxu0 0
      %267 = vmatprep.subr.bf16.mxu0 0
      %268 = vmatpush1.bf16.msra.mxu0 0
      %269 = vmatprep.subr.bf16.mxu0 0
      %270 = vmatpush1.bf16.msra.mxu0 0
      %271 = vmatprep.subr.bf16.mxu0 0
      %272 = vmatpush1.bf16.msra.mxu0 0
      %273 = vmatprep.subr.bf16.mxu0 0
      %274 = vmatpush1.bf16.msra.mxu0 0
      %275 = vmatprep.subr.bf16.mxu0 0
      %276 = vmatpush1.bf16.msra.mxu0 0
      %277 = vmatprep.subr.bf16.mxu0 0
      %278 = vmatpush1.bf16.msra.mxu0 0
      %279 = vmatprep.subr.bf16.mxu0 0
      %280 = vmatpush1.bf16.msra.mxu0 0
      %281 = vmatprep.subr.bf16.mxu0 0
      %282 = vmatpush1.bf16.msra.mxu0 0
      %283 = vmatprep.subr.bf16.mxu0 0
      %284 = vmatpush1.bf16.msra.mxu0 0
      %285 = vmatprep.subr.bf16.mxu0 0
      %286 = vmatpush1.bf16.msra.mxu0 0
      %287 = vmatprep.subr.bf16.mxu0 0
      %288 = vmatpush1.bf16.msra.mxu0 0
      %289 = vmatprep.subr.bf16.mxu0 0
      %290 = vmatpush1.bf16.msra.mxu0 0
      %291 = vmatprep.subr.bf16.mxu0 0
      %292 = vmatpush1.bf16.msra.mxu0 0
      %293 = vmatprep.mubr.bf16.mxu0 0
      %294 = vmatmul.mubr.bf16.gmra.mrb[0].mxu0 %v259
      %v295 = vpop.f32.mrb[0].mxu0
      %v296 = vadd.f32 0.0, %v295
      %v297 = vpop.f32.mrb[0].mxu0
      %v298 = vpop.f32.mrb[0].mxu0
      %v299 = vpop.f32.mrb[0].mxu0
      %300 = vdwg.mxu0
      %301 = vst [vmem:[%s202] sm:$0xff] %v296
      %p302 = scmp.lt.s32.totalorder %s18, 1
      %s303 = scalar_select %p302, %s18, 1
      %p304 = scmp.lt.s32.totalorder %s19, 0
      %s305 = scalar_select %p304, %s19, 0
      %s306 = sadd.s32 %s305, %s303
      %s307 = smul.addr %s306, 8
      %s308 = scalar_lea.vmem %s3, %s307
      // Predicated region
      $region37: #{_lambda_.7} parent=31 // pred_check
        %p309 = pneg %p119
      $region38: #{_lambda_.7} parent=31 // pred_check_branch
        %311 = sbr.rel (%p309) target = $region40
      $region39: #{_lambda_.7} parent=31 // pred_region
        _
      $region40: #{_lambda_.7} parent=31 // pred_fallthru
        _
    $region32: #{_lambda_.7} parent=5 // pred_fallthru
      _
    %p312 = scmp.le.s32.totalorder 2, %s9
    // Predicated region
    $region41: #{_lambda_.7} parent=5 // pred_check
      %p313 = pneg %p312
    $region42: #{_lambda_.7} parent=5 // pred_check_branch
      %315 = sbr.rel (%p313) target = $region44
    $region43: #{_lambda_.7} parent=5 // pred_region
      %s316 = ssub.s32 %s9, 2
      // Predicated region
      $region45: #{_lambda_.7} parent=43 // pred_check
        %p317 = pneg %p125
      $region46: #{_lambda_.7} parent=43 // pred_check_branch
        %319 = sbr.rel (%p317) target = $region48
      $region47: #{_lambda_.7} parent=43 // pred_region
        %p320 = scmp.lt.s32.totalorder %s20, 1
        %s321 = scalar_select %p320, %s20, 1
        %p322 = scmp.lt.s32.totalorder %s21, 0
        %s323 = scalar_select %p322, %s21, 0
        %s324 = sadd.s32 %s323, %s321
        %s325 = smul.addr %s324, 8
        %s326 = scalar_lea.vmem %s3, %s325
      $region48: #{_lambda_.7} parent=43 // pred_fallthru
        _
    $region44: #{_lambda_.7} parent=5 // pred_fallthru
      _
  $region6: #{_lambda_.7} parent=0 // loop_footer
    %s13 = sadd.s32 1, %s9
  $region7: #{_lambda_.7} parent=0 // loop_footer_branch
    %8 = sbr.rel target = $region3
  $region8: #{_lambda_.7} parent=0 // loop_exit
    _

// kernel: _lambda_.4
$region0: #{_lambda_.4}
  #allocation0 [shape = 'u32[]', space=smem, size = 0x4, offset = 0x4, fixed_abs, tag = 'smem constant byte address 0x4 - core index']
  #allocation1 [shape = 'u32[144,128]{1,0:T(1,128)}', space=vmem, size = 0x12000, scoped, tag = 'internal scratch']
  %s0 = inlined_call_operand.vmem [shape: bf16[16,32], index: 0, kind: input, shape index: {}, may-alias: {0,6}]
  %s1 = inlined_call_operand.vmem [shape: bf16[32,32], index: 1, kind: input, shape index: {}]
  %s2 = inlined_call_operand.vmem [shape: f32[8,32], index: 2, kind: input, shape index: {}]
  %s3 = inlined_call_operand.vmem [shape: f32[1,128], index: 3, kind: input, shape index: {}]
  %s4 = inlined_call_operand.vmem [shape: bf16[32,128], index: 4, kind: input, shape index: {}]
  %s5 = inlined_call_operand.vmem [shape: bf16[128,32], index: 5, kind: input, shape index: {}]
  %s6 = inlined_call_operand.vmem [shape: bf16[16,32], index: 6, kind: output, shape index: {}, may-alias: {0,6}]
  %s7 = sld [smem:[#allocation0]]
  $region57: #{_lambda_.4} parent=0
    _
  %s9 = ssub.s32 1, %s7
  %s10 = scalar_select 0, %s9, %s7
  loop: start=0, step=1, limit=4
  $region2: #{_lambda_.4} parent=0 // loop_pre_header
    _
  $region3: #{_lambda_.4} parent=0 // loop_header
    %s12 = sphi 0, %s16
    %p13 = scmp.ge.s32.totalorder %s12, 4
    %s22 = sphi 0, %s24
    %s25 = sphi 0, %s22
    %s26 = sphi 0, %s25
    %s42 = sphi 0, %s26
    %s46 = sphi 0, %s46
    %s48 = sphi 0, %s46
    %s49 = sphi 0, %s48
    %s63 = sphi 0, %s49
    %s67 = sphi 0, %s67
    %s69 = sphi 0, %s67
    %s70 = sphi 0, %s69
    %s84 = sphi 0, %s70
    %s88 = sphi 0, %s88
    %s90 = sphi 0, %s88
    %s91 = sphi 0, %s90
    %s105 = sphi 0, %s91
    %s109 = sphi 0, %s109
    %s111 = sphi 0, %s109
    %s112 = sphi 0, %s111
    %s126 = sphi 0, %s112
    %s130 = sphi 0, %s130
    %s132 = sphi 0, %s130
    %s133 = sphi 0, %s132
    %s147 = sphi 0, %s133
    %s153 = sphi 0, %s155
    %s156 = sphi 0, %s153
    %s157 = sphi 0, %s156
    %s173 = sphi 0, %s157
  $region4: #{_lambda_.4} parent=0 // loop_header_branch
    %15 = sbr.rel (%p13) target = $region8
  $region5: #{_lambda_.4} parent=0 // loop_body
    %s17 = ssub.s32 %s12, 1
    %s18 = ssub.s32 %s12, 2
    %s19 = sadd.s32 %s12, 1
    %s20 = ssub.s32 %s12, %s19
    %p21 = scmp.eq.s32.totalorder %s20, 0
    %s23 = sadd.s32 %s22, 1
    %s24 = scalar_select %p21, %s22, %s23
    %p27 = pneg %p21
    %p28 = scmp.eq.s32.totalorder %s12, 1
    %p29 = por %p27, %p28
    %p30 = scmp.ne.s32.totalorder %s22, %s25
    %p31 = scmp.eq.s32.totalorder %s12, 0
    %p32 = por %p30, %p31
    %p33 = scmp.ne.s32.totalorder %s22, %s25
    %p34 = scmp.eq.s32.totalorder %s17, 1
    %p35 = por %p33, %p34
    %p36 = scmp.ne.s32.totalorder %s25, %s26
    %p37 = scmp.eq.s32.totalorder %s17, 0
    %p38 = por %p36, %p37
    %p39 = scmp.ne.s32.totalorder %s25, %s26
    %p40 = scmp.eq.s32.totalorder %s18, 1
    %p41 = por %p39, %p40
    %p43 = scmp.ne.s32.totalorder %s26, %s42
    %p44 = scmp.eq.s32.totalorder %s18, 0
    %p45 = por %p43, %p44
    %s47 = sadd.s32 %s46, 1
    %p50 = scmp.eq.s32.totalorder %s12, 1
    %p51 = scmp.ne.s32.totalorder %s46, %s48
    %p52 = scmp.eq.s32.totalorder %s12, 0
    %p53 = por %p51, %p52
    %p54 = scmp.ne.s32.totalorder %s46, %s48
    %p55 = scmp.eq.s32.totalorder %s17, 1
    %p56 = por %p54, %p55
    %p57 = scmp.ne.s32.totalorder %s48, %s49
    %p58 = scmp.eq.s32.totalorder %s17, 0
    %p59 = por %p57, %p58
    %p60 = scmp.ne.s32.totalorder %s48, %s49
    %p61 = scmp.eq.s32.totalorder %s18, 1
    %p62 = por %p60, %p61
    %p64 = scmp.ne.s32.totalorder %s49, %s63
    %p65 = scmp.eq.s32.totalorder %s18, 0
    %p66 = por %p64, %p65
    %s68 = sadd.s32 %s67, 1
    %p71 = scmp.eq.s32.totalorder %s12, 1
    %p72 = scmp.ne.s32.totalorder %s67, %s69
    %p73 = scmp.eq.s32.totalorder %s12, 0
    %p74 = por %p72, %p73
    %p75 = scmp.ne.s32.totalorder %s67, %s69
    %p76 = scmp.eq.s32.totalorder %s17, 1
    %p77 = por %p75, %p76
    %p78 = scmp.ne.s32.totalorder %s69, %s70
    %p79 = scmp.eq.s32.totalorder %s17, 0
    %p80 = por %p78, %p79
    %p81 = scmp.ne.s32.totalorder %s69, %s70
    %p82 = scmp.eq.s32.totalorder %s18, 1
    %p83 = por %p81, %p82
    %p85 = scmp.ne.s32.totalorder %s70, %s84
    %p86 = scmp.eq.s32.totalorder %s18, 0
    %p87 = por %p85, %p86
    %s89 = sadd.s32 %s88, 1
    %p92 = scmp.eq.s32.totalorder %s12, 1
    %p93 = scmp.ne.s32.totalorder %s88, %s90
    %p94 = scmp.eq.s32.totalorder %s12, 0
    %p95 = por %p93, %p94
    %p96 = scmp.ne.s32.totalorder %s88, %s90
    %p97 = scmp.eq.s32.totalorder %s17, 1
    %p98 = por %p96, %p97
    %p99 = scmp.ne.s32.totalorder %s90, %s91
    %p100 = scmp.eq.s32.totalorder %s17, 0
    %p101 = por %p99, %p100
    %p102 = scmp.ne.s32.totalorder %s90, %s91
    %p103 = scmp.eq.s32.totalorder %s18, 1
    %p104 = por %p102, %p103
    %p106 = scmp.ne.s32.totalorder %s91, %s105
    %p107 = scmp.eq.s32.totalorder %s18, 0
    %p108 = por %p106, %p107
    %s110 = sadd.s32 %s109, 1
    %p113 = scmp.eq.s32.totalorder %s12, 1
    %p114 = scmp.ne.s32.totalorder %s109, %s111
    %p115 = scmp.eq.s32.totalorder %s12, 0
    %p116 = por %p114, %p115
    %p117 = scmp.ne.s32.totalorder %s109, %s111
    %p118 = scmp.eq.s32.totalorder %s17, 1
    %p119 = por %p117, %p118
    %p120 = scmp.ne.s32.totalorder %s111, %s112
    %p121 = scmp.eq.s32.totalorder %s17, 0
    %p122 = por %p120, %p121
    %p123 = scmp.ne.s32.totalorder %s111, %s112
    %p124 = scmp.eq.s32.totalorder %s18, 1
    %p125 = por %p123, %p124
    %p127 = scmp.ne.s32.totalorder %s112, %s126
    %p128 = scmp.eq.s32.totalorder %s18, 0
    %p129 = por %p127, %p128
    %s131 = sadd.s32 %s130, 1
    %p134 = scmp.eq.s32.totalorder %s12, 1
    %p135 = scmp.ne.s32.totalorder %s130, %s132
    %p136 = scmp.eq.s32.totalorder %s12, 0
    %p137 = por %p135, %p136
    %p138 = scmp.ne.s32.totalorder %s130, %s132
    %p139 = scmp.eq.s32.totalorder %s17, 1
    %p140 = por %p138, %p139
    %p141 = scmp.ne.s32.totalorder %s132, %s133
    %p142 = scmp.eq.s32.totalorder %s17, 0
    %p143 = por %p141, %p142
    %p144 = scmp.ne.s32.totalorder %s132, %s133
    %p145 = scmp.eq.s32.totalorder %s18, 1
    %p146 = por %p144, %p145
    %p148 = scmp.ne.s32.totalorder %s133, %s147
    %p149 = scmp.eq.s32.totalorder %s18, 0
    %p150 = por %p148, %p149
    %s151 = ssub.s32 %s12, %s19
    %p152 = scmp.eq.s32.totalorder %s151, 0
    %s154 = sadd.s32 %s153, 1
    %s155 = scalar_select %p152, %s153, %s154
    %p158 = pneg %p152
    %p159 = scmp.eq.s32.totalorder %s12, 1
    %p160 = por %p158, %p159
    %p161 = scmp.ne.s32.totalorder %s153, %s156
    %p162 = scmp.eq.s32.totalorder %s12, 0
    %p163 = por %p161, %p162
    %p164 = scmp.ne.s32.totalorder %s153, %s156
    %p165 = scmp.eq.s32.totalorder %s17, 1
    %p166 = por %p164, %p165
    %p167 = scmp.ne.s32.totalorder %s156, %s157
    %p168 = scmp.eq.s32.totalorder %s17, 0
    %p169 = por %p167, %p168
    %p170 = scmp.ne.s32.totalorder %s156, %s157
    %p171 = scmp.eq.s32.totalorder %s18, 1
    %p172 = por %p170, %p171
    %p174 = scmp.ne.s32.totalorder %s157, %s173
    %p175 = scmp.eq.s32.totalorder %s18, 0
    %p176 = por %p174, %p175
    %p177 = scmp.le.s32.totalorder 1, %s12
    %p178 = scmp.lt.s32.totalorder %s12, 3
    %p179 = pnand %p177, %p178
    %p180 = pneg %p179
    // Predicated region
    $region9: #{_lambda_.4} parent=5 // pred_check
      _
    $region10: #{_lambda_.4} parent=5 // pred_check_branch
      %182 = sbr.rel (%p179) target = $region12
    $region11: #{_lambda_.4} parent=5 // pred_region
      %s183 = ssub.s32 %s12, 1
      // Predicated region
      $region13: #{_lambda_.4} parent=11 // pred_check
        %p184 = pneg %p59
      $region14: #{_lambda_.4} parent=11 // pred_check_branch
        %186 = sbr.rel (%p184) target = $region16
      $region15: #{_lambda_.4} parent=11 // pred_region
        _
      $region16: #{_lambda_.4} parent=11 // pred_fallthru
        _
      // Predicated region
      $region17: #{_lambda_.4} parent=11 // pred_check
        %p187 = pneg %p80
      $region18: #{_lambda_.4} parent=11 // pred_check_branch
        %189 = sbr.rel (%p187) target = $region20
      $region19: #{_lambda_.4} parent=11 // pred_region
        _
      $region20: #{_lambda_.4} parent=11 // pred_fallthru
        _
      // Predicated region
      $region21: #{_lambda_.4} parent=11 // pred_check
        %p190 = pneg %p101
      $region22: #{_lambda_.4} parent=11 // pred_check_branch
        %192 = sbr.rel (%p190) target = $region24
      $region23: #{_lambda_.4} parent=11 // pred_region
        _
      $region24: #{_lambda_.4} parent=11 // pred_fallthru
        _
      // Predicated region
      $region25: #{_lambda_.4} parent=11 // pred_check
        %p193 = pneg %p122
      $region26: #{_lambda_.4} parent=11 // pred_check_branch
        %195 = sbr.rel (%p193) target = $region28
      $region27: #{_lambda_.4} parent=11 // pred_region
        _
      $region28: #{_lambda_.4} parent=11 // pred_fallthru
        _
      // Predicated region
      $region29: #{_lambda_.4} parent=11 // pred_check
        %p196 = pneg %p143
      $region30: #{_lambda_.4} parent=11 // pred_check_branch
        %198 = sbr.rel (%p196) target = $region32
      $region31: #{_lambda_.4} parent=11 // pred_region
        _
      $region32: #{_lambda_.4} parent=11 // pred_fallthru
        _
    $region12: #{_lambda_.4} parent=5 // pred_fallthru
      _
    %p199 = scmp.lt.s32.totalorder %s12, 2
    // Predicated region
    $region33: #{_lambda_.4} parent=5 // pred_check
      %p200 = pneg %p199
    $region34: #{_lambda_.4} parent=5 // pred_check_branch
      %202 = sbr.rel (%p200) target = $region36
    $region35: #{_lambda_.4} parent=5 // pred_region
      // Predicated region
      $region37: #{_lambda_.4} parent=35 // pred_check
        %p203 = pneg %p32
      $region38: #{_lambda_.4} parent=35 // pred_check_branch
        %205 = sbr.rel (%p203) target = $region40
      $region39: #{_lambda_.4} parent=35 // pred_region
        %p206 = scmp.lt.s32.totalorder %s12, 1
        %s207 = scalar_select %p206, %s12, 1
        %s208 = smul.addr %s207, 4
        %s209 = scalar_lea.vmem %s0, %s208
      $region40: #{_lambda_.4} parent=35 // pred_fallthru
        _
    $region36: #{_lambda_.4} parent=5 // pred_fallthru
      _
    %p210 = scmp.le.s32.totalorder 1, %s12
    %p211 = scmp.lt.s32.totalorder %s12, 3
    %p212 = pnand %p210, %p211
    %p213 = pneg %p212
    // Predicated region
    $region41: #{_lambda_.4} parent=5 // pred_check
      _
    $region42: #{_lambda_.4} parent=5 // pred_check_branch
      %215 = sbr.rel (%p212) target = $region44
    $region43: #{_lambda_.4} parent=5 // pred_region
      %s216 = ssub.s32 %s12, 1
      %p217 = scmp.lt.s32.totalorder %s17, 1
      %s218 = scalar_select %p217, %s17, 1
      %s219 = smul.addr %s218, 4
      %s220 = scalar_lea.vmem %s0, %s219
      %p221 = pneg %p38
      %p222 = pneg %p35
      %p223 = pneg %p59
      %p224 = pneg %p56
      %p225 = pneg %p80
      %p226 = pneg %p77
      %p227 = pneg %p101
      %p228 = pneg %p98
      %p229 = pneg %p122
      %p230 = pneg %p119
      %p231 = pneg %p143
      %p232 = pneg %p140
      %p233 = pneg %p169
      %p234 = pneg %p166
      %p235 = scmp.lt.s32.totalorder %s17, 1
      %s236 = scalar_select %p235, %s17, 1
      %s237 = smul.addr %s236, 4
      %s238 = scalar_lea.vmem %s6, %s237
      %p239 = scmp.lt.s32.totalorder %s17, 1
      %s240 = scalar_select %p239, %s17, 1
      %s241 = smul.addr %s240, 4
      %s242 = scalar_lea.vmem %s0, %s241
      %p243 = scmp.lt.s32.totalorder %s17, 1
      %s244 = scalar_select %p243, %s17, 1
      %s245 = smul.addr %s244, 4
      %s246 = scalar_lea.vmem %s6, %s245
      %v248 = vld [vmem:[%s242] sm:$0xf]
      %v249 = vunpack.c.l.bf16 %v248
      %v250 = vld [vmem:[%s2] sm:$0xff]
      %vm251 = vcmask 261120
      %v252 = vsel %vm251, %v249, 0.0
      %253 = vadd.xlane.f32.xlu0 %v252
      %v254 = vpop.xlane.xlu0 %253
      %v255 = vrcp.pop 32.0
      %v256 = vmul.f32 %v254, %v255
      %v257 = vsub.f32 %v249, %v256
      %v258 = vmul.f32 %v257, %v257
      %v259 = vsel %vm251, %v258, 0.0
      %260 = vadd.xlane.f32.xlu0 %v259
      %v261 = vpop.xlane.xlu0 %260
      %v262 = vmul.f32 %v261, %v255
      %v263 = vadd.f32 %v262, 1e-05
      %v264 = vrsqrt.pop %v263
      %v265 = vmul.f32 %v257, %v264
      %v266 = vlaneseq
      %v267 = vshrl.u32 %v266, 7
      %v268 = vsub.s32 0, %v267
      %v269 = vrot.slane %v250, %v268
      %v270 = vmul.f32 %v265, %v269
      %v271 = vlaneseq
      %v272 = vshrl.u32 %v271, 7
      %v273 = vsub.s32 1, %v272
      %v274 = vrot.slane %v250, %v273
      %v275 = vadd.f32 %v270, %v274
      %v276 = vpack.c.bf16 %v275, %v275
      %v277 = vld [vmem:[%s1] sm:$0xf]
      %v278 = vld [vmem:[%s1 + $0x4] sm:$0xf]
      %v279 = vld [vmem:[%s1 + $0x8] sm:$0xf]
      %v280 = vld [vmem:[%s1 + $0xc] sm:$0xf]
      %v285 = vunpack.c.l.b16 %v277
      %v286 = vunpack.c.l.b16 %v278
      %v287 = vunpack.c.l.b16 %v279
      %v288 = vunpack.c.l.b16 %v280
      %v289 = vpack.c.b16 %v286, %v285
      %v290 = vpack.c.b16 %v288, %v287
      %v294 = vsel %vm251, %v276, 0
      %296 = vmatprep.subr.bf16.mxu0 0
      %297 = vmatpush1.bf16.msra.mxu0 %v289
      %298 = vmatprep.subr.bf16.mxu0 0
      %299 = vmatpush1.bf16.msra.mxu0 %v290
      %300 = vmatprep.subr.bf16.mxu0 0
      %301 = vmatpush1.bf16.msra.mxu0 0
      %302 = vmatprep.subr.bf16.mxu0 0
      %303 = vmatpush1.bf16.msra.mxu0 0
      %304 = vmatprep.subr.bf16.mxu0 0
      %305 = vmatpush1.bf16.msra.mxu0 0
      %306 = vmatprep.subr.bf16.mxu0 0
      %307 = vmatpush1.bf16.msra.mxu0 0
      %308 = vmatprep.subr.bf16.mxu0 0
      %309 = vmatpush1.bf16.msra.mxu0 0
      %310 = vmatprep.subr.bf16.mxu0 0
      %311 = vmatpush1.bf16.msra.mxu0 0
      %312 = vmatprep.subr.bf16.mxu0 0
      %313 = vmatpush1.bf16.msra.mxu0 0
      %314 = vmatprep.subr.bf16.mxu0 0
      %315 = vmatpush1.bf16.msra.mxu0 0
      %316 = vmatprep.subr.bf16.mxu0 0
      %317 = vmatpush1.bf16.msra.mxu0 0
      %318 = vmatprep.subr.bf16.mxu0 0
      %319 = vmatpush1.bf16.msra.mxu0 0
      %320 = vmatprep.subr.bf16.mxu0 0
      %321 = vmatpush1.bf16.msra.mxu0 0
      %322 = vmatprep.subr.bf16.mxu0 0
      %323 = vmatpush1.bf16.msra.mxu0 0
      %324 = vmatprep.subr.bf16.mxu0 0
      %325 = vmatpush1.bf16.msra.mxu0 0
      %326 = vmatprep.subr.bf16.mxu0 0
      %327 = vmatpush1.bf16.msra.mxu0 0
      %328 = vmatprep.mubr.bf16.mxu0 0
      %329 = vmatmul.mubr.bf16.gmra.mrb[0].mxu0 %v294
      %v330 = vpop.f32.mrb[0].mxu0
      %v331 = vadd.f32 0.0, %v330
      %v332 = vpop.f32.mrb[0].mxu0
      %v333 = vpop.f32.mrb[0].mxu0
      %v334 = vpop.f32.mrb[0].mxu0
      %335 = vdwg.mxu0
      %v336 = vsel %vm251, %v331, 0.0
      %337 = vadd.xlane.f32.xlu0 %v336
      %v338 = vpop.xlane.xlu0 %337
      %v339 = vmul.f32 %v338, %v255
      %v340 = vsub.f32 %v331, %v339
      %v341 = vmul.f32 %v340, %v340
      %v342 = vsel %vm251, %v341, 0.0
      %343 = vadd.xlane.f32.xlu0 %v342
      %v344 = vpop.xlane.xlu0 %343
      %v345 = vmul.f32 %v344, %v255
      %v346 = vadd.f32 %v345, 1e-05
      %v347 = vrsqrt.pop %v346
      %v348 = vmul.f32 %v340, %v347
      %v349 = vlaneseq
      %v350 = vshrl.u32 %v349, 7
      %v351 = vsub.s32 2, %v350
      %v352 = vrot.slane %v250, %v351
      %v353 = vmul.f32 %v348, %v352
      %v354 = vlaneseq
      %v355 = vshrl.u32 %v354, 7
      %v356 = vsub.s32 3, %v355
      %v357 = vrot.slane %v250, %v356
      %v358 = vadd.f32 %v353, %v357
      %v359 = vadd.f32 %v249, %v358
      %v360 = vsel %vm251, %v359, 0.0
      %361 = vadd.xlane.f32.xlu0 %v360
      %v362 = vpop.xlane.xlu0 %361
      %v363 = vmul.f32 %v362, %v255
      %v364 = vsub.f32 %v359, %v363
      %v365 = vmul.f32 %v364, %v364
      %v366 = vsel %vm251, %v365, 0.0
      %367 = vadd.xlane.f32.xlu0 %v366
      %v368 = vpop.xlane.xlu0 %367
      %v369 = vmul.f32 %v368, %v255
      %v370 = vadd.f32 %v369, 1e-05
      %v371 = vrsqrt.pop %v370
      %v372 = vmul.f32 %v364, %v371
      %v373 = vlaneseq
      %v374 = vshrl.u32 %v373, 7
      %v375 = vsub.s32 4, %v374
      %v376 = vrot.slane %v250, %v375
      %v377 = vmul.f32 %v372, %v376
      %v378 = vlaneseq
      %v379 = vshrl.u32 %v378, 7
      %v380 = vsub.s32 5, %v379
      %v381 = vrot.slane %v250, %v380
      %v382 = vadd.f32 %v377, %v381
      %v383 = vpack.c.bf16 %v382, %v382
      %v384 = vld [vmem:[%s4] sm:$0xf]
      %v385 = vld [vmem:[%s4 + $0x4] sm:$0xf]
      %v386 = vld [vmem:[%s4 + $0x8] sm:$0xf]
      %v387 = vld [vmem:[%s4 + $0xc] sm:$0xf]
      %v388 = vld [vmem:[%s3] sm:$0x1]
      %v390 = vlaneseq
      %v391 = vshrl.u32 %v390, 7
      %v392 = vsub.s32 0, %v391
      %v393 = vrot.slane %v388, %v392
      %v399 = vunpack.c.l.b16 %v384
      %v400 = vunpack.c.l.b16 %v385
      %v401 = vunpack.c.l.b16 %v386
      %v402 = vunpack.c.l.b16 %v387
      %v403 = vpack.c.b16 %v400, %v399
      %v404 = vpack.c.b16 %v402, %v401
      %v408 = vsel %vm251, %v383, 0
      %410 = vmatprep.subr.bf16.mxu0 0
      %411 = vmatpush1.bf16.msra.mxu0 %v403
      %412 = vmatprep.subr.bf16.mxu0 0
      %413 = vmatpush1.bf16.msra.mxu0 %v404
      %414 = vmatprep.subr.bf16.mxu0 0
      %415 = vmatpush1.bf16.msra.mxu0 0
      %416 = vmatprep.subr.bf16.mxu0 0
      %417 = vmatpush1.bf16.msra.mxu0 0
      %418 = vmatprep.subr.bf16.mxu0 0
      %419 = vmatpush1.bf16.msra.mxu0 0
      %420 = vmatprep.subr.bf16.mxu0 0
      %421 = vmatpush1.bf16.msra.mxu0 0
      %422 = vmatprep.subr.bf16.mxu0 0
      %423 = vmatpush1.bf16.msra.mxu0 0
      %424 = vmatprep.subr.bf16.mxu0 0
      %425 = vmatpush1.bf16.msra.mxu0 0
      %426 = vmatprep.subr.bf16.mxu0 0
      %427 = vmatpush1.bf16.msra.mxu0 0
      %428 = vmatprep.subr.bf16.mxu0 0
      %429 = vmatpush1.bf16.msra.mxu0 0
      %430 = vmatprep.subr.bf16.mxu0 0
      %431 = vmatpush1.bf16.msra.mxu0 0
      %432 = vmatprep.subr.bf16.mxu0 0
      %433 = vmatpush1.bf16.msra.mxu0 0
      %434 = vmatprep.subr.bf16.mxu0 0
      %435 = vmatpush1.bf16.msra.mxu0 0
      %436 = vmatprep.subr.bf16.mxu0 0
      %437 = vmatpush1.bf16.msra.mxu0 0
      %438 = vmatprep.subr.bf16.mxu0 0
      %439 = vmatpush1.bf16.msra.mxu0 0
      %440 = vmatprep.subr.bf16.mxu0 0
      %441 = vmatpush1.bf16.msra.mxu0 0
      %442 = vmatprep.mubr.bf16.mxu0 0
      %443 = vmatmul.mubr.bf16.gmra.mrb[0].mxu0 %v408
      %v444 = vpop.f32.mrb[0].mxu0
      %v445 = vadd.f32 %v393, %v444
      %v446 = vpop.f32.mrb[0].mxu0
      %v447 = vpop.f32.mrb[0].mxu0
      %v448 = vpop.f32.mrb[0].mxu0
      %449 = vdwg.mxu0
      %v450 = vmul.f32 %v445, 0.5
      %v451 = vmul.f32 %v445, 0.70710677
      %vm452 = vcmp.lt.f32.partialorder %v451, 0.0
      %v453 = vsel %vm452, -1.0, 1.0
      %v454 = vand.u32 2147483647, %v451
      %v455 = vmul.f32 %v454, 0.3275911
      %v456 = vadd.f32 %v455, 1.0
      %v457 = vrcp.pop %v456
      %v458 = vmul.f32 %v457, 1.0614054
      %v459 = vadd.f32 %v458, -1.4531521
      %v460 = vmul.f32 %v459, %v457
      %v461 = vadd.f32 %v460, 1.4214138
      %v462 = vmul.f32 %v461, %v457
      %v463 = vadd.f32 %v462, -0.28449672
      %v464 = vmul.f32 %v463, %v457
      %v465 = vadd.f32 %v464, 0.2548296
      %v466 = vmul.f32 %v465, %v457
      %v467 = vsub.f32 0.0, %v454
      %v468 = vmul.f32 %v467, %v454
      %v469 = vmul.f32 %v468, 1.442695
      %v470 = vpow.pop %v469
      %v471 = vmul.f32 %v466, %v470
      %v472 = vsub.f32 1.0, %v471
      %v473 = vmul.f32 %v453, %v472
      %v474 = vadd.f32 %v473, 1.0
      %v475 = vmul.f32 %v450, %v474
      %v476 = vpack.c.bf16 %v475, %v475
      %v477 = vld [vmem:[%s5] sm:$0xf]
      %v478 = vld [vmem:[%s5 + $0x4] sm:$0xf]
      %v479 = vld [vmem:[%s5 + $0x8] sm:$0xf]
      %v480 = vld [vmem:[%s5 + $0xc] sm:$0xf]
      %v481 = vld [vmem:[%s5 + $0x10] sm:$0xf]
      %v482 = vld [vmem:[%s5 + $0x14] sm:$0xf]
      %v483 = vld [vmem:[%s5 + $0x18] sm:$0xf]
      %v484 = vld [vmem:[%s5 + $0x1c] sm:$0xf]
      %v485 = vld [vmem:[%s5 + $0x20] sm:$0xf]
      %v486 = vld [vmem:[%s5 + $0x24] sm:$0xf]
      %v487 = vld [vmem:[%s5 + $0x28] sm:$0xf]
      %v488 = vld [vmem:[%s5 + $0x2c] sm:$0xf]
      %v489 = vld [vmem:[%s5 + $0x30] sm:$0xf]
      %v490 = vld [vmem:[%s5 + $0x34] sm:$0xf]
      %v491 = vld [vmem:[%s5 + $0x38] sm:$0xf]
      %v492 = vld [vmem:[%s5 + $0x3c] sm:$0xf]
      %v493 = vlaneseq
      %v494 = vshrl.u32 %v493, 7
      %v495 = vsub.s32 6, %v494
      %v496 = vrot.slane %v250, %v495
      %v513 = vunpack.c.l.b16 %v477
      %v514 = vunpack.c.l.b16 %v478
      %v515 = vunpack.c.l.b16 %v479
      %v516 = vunpack.c.l.b16 %v480
      %v517 = vunpack.c.l.b16 %v481
      %v518 = vunpack.c.l.b16 %v482
      %v519 = vunpack.c.l.b16 %v483
      %v520 = vunpack.c.l.b16 %v484
      %v521 = vunpack.c.l.b16 %v485
      %v522 = vunpack.c.l.b16 %v486
      %v523 = vunpack.c.l.b16 %v487
      %v524 = vunpack.c.l.b16 %v488
      %v525 = vunpack.c.l.b16 %v489
      %v526 = vunpack.c.l.b16 %v490
      %v527 = vunpack.c.l.b16 %v491
      %v528 = vunpack.c.l.b16 %v492
      %v529 = vpack.c.b16 %v514, %v513
      %v530 = vpack.c.b16 %v516, %v515
      %v531 = vpack.c.b16 %v518, %v517
      %v532 = vpack.c.b16 %v520, %v519
      %v533 = vpack.c.b16 %v522, %v521
      %v534 = vpack.c.b16 %v524, %v523
      %v535 = vpack.c.b16 %v526, %v525
      %v536 = vpack.c.b16 %v528, %v527
      %545 = vmatprep.subr.bf16.mxu0 0
      %546 = vmatpush1.bf16.msra.mxu0 %v529
      %547 = vmatprep.subr.bf16.mxu0 0
      %548 = vmatpush1.bf16.msra.mxu0 %v530
      %549 = vmatprep.subr.bf16.mxu0 0
      %550 = vmatpush1.bf16.msra.mxu0 %v531
      %551 = vmatprep.subr.bf16.mxu0 0
      %552 = vmatpush1.bf16.msra.mxu0 %v532
      %553 = vmatprep.subr.bf16.mxu0 0
      %554 = vmatpush1.bf16.msra.mxu0 %v533
      %555 = vmatprep.subr.bf16.mxu0 0
      %556 = vmatpush1.bf16.msra.mxu0 %v534
      %557 = vmatprep.subr.bf16.mxu0 0
      %558 = vmatpush1.bf16.msra.mxu0 %v535
      %559 = vmatprep.subr.bf16.mxu0 0
      %560 = vmatpush1.bf16.msra.mxu0 %v536
      %561 = vmatprep.subr.bf16.mxu0 0
      %562 = vmatpush1.bf16.msra.mxu0 0
      %563 = vmatprep.subr.bf16.mxu0 0
      %564 = vmatpush1.bf16.msra.mxu0 0
      %565 = vmatprep.subr.bf16.mxu0 0
      %566 = vmatpush1.bf16.msra.mxu0 0
      %567 = vmatprep.subr.bf16.mxu0 0
      %568 = vmatpush1.bf16.msra.mxu0 0
      %569 = vmatprep.subr.bf16.mxu0 0
      %570 = vmatpush1.bf16.msra.mxu0 0
      %571 = vmatprep.subr.bf16.mxu0 0
      %572 = vmatpush1.bf16.msra.mxu0 0
      %573 = vmatprep.subr.bf16.mxu0 0
      %574 = vmatpush1.bf16.msra.mxu0 0
      %575 = vmatprep.subr.bf16.mxu0 0
      %576 = vmatpush1.bf16.msra.mxu0 0
      %577 = vmatprep.mubr.bf16.mxu0 0
      %578 = vmatmul.mubr.bf16.gmra.mrb[0].mxu0 %v476
      %v579 = vpop.f32.mrb[0].mxu0
      %v580 = vadd.f32 %v496, %v579
      %v581 = vpop.f32.mrb[0].mxu0
      %v582 = vpop.f32.mrb[0].mxu0
      %v583 = vpop.f32.mrb[0].mxu0
      %584 = vdwg.mxu0
      %v585 = vadd.f32 %v359, %v580
      %v586 = vpack.c.bf16 %v585, %v585
      %vm587 = vcmask 257024
      %588 = vst.msk [vmem:[%s246] sm:$0xf] %vm587, %v586
      %p589 = scmp.lt.s32.totalorder %s17, 1
      %s590 = scalar_select %p589, %s17, 1
      %s591 = smul.addr %s590, 4
      %s592 = scalar_lea.vmem %s6, %s591
      // Predicated region
      $region45: #{_lambda_.4} parent=43 // pred_check
        %p593 = pneg %p166
      $region46: #{_lambda_.4} parent=43 // pred_check_branch
        %595 = sbr.rel (%p593) target = $region48
      $region47: #{_lambda_.4} parent=43 // pred_region
        _
      $region48: #{_lambda_.4} parent=43 // pred_fallthru
        _
    $region44: #{_lambda_.4} parent=5 // pred_fallthru
      _
    %p596 = scmp.le.s32.totalorder 2, %s12
    // Predicated region
    $region49: #{_lambda_.4} parent=5 // pred_check
      %p597 = pneg %p596
    $region50: #{_lambda_.4} parent=5 // pred_check_branch
      %599 = sbr.rel (%p597) target = $region52
    $region51: #{_lambda_.4} parent=5 // pred_region
      %s600 = ssub.s32 %s12, 2
      // Predicated region
      $region53: #{_lambda_.4} parent=51 // pred_check
        %p601 = pneg %p172
      $region54: #{_lambda_.4} parent=51 // pred_check_branch
        %603 = sbr.rel (%p601) target = $region56
      $region55: #{_lambda_.4} parent=51 // pred_region
        %p604 = scmp.lt.s32.totalorder %s18, 1
        %s605 = scalar_select %p604, %s18, 1
        %s606 = smul.addr %s605, 4
        %s607 = scalar_lea.vmem %s6, %s606
      $region56: #{_lambda_.4} parent=51 // pred_fallthru
        _
    $region52: #{_lambda_.4} parent=5 // pred_fallthru
      _
  $region6: #{_lambda_.4} parent=0 // loop_footer
    %s16 = sadd.s32 1, %s12
  $region7: #{_lambda_.4} parent=0 // loop_footer_branch
    %11 = sbr.rel target = $region3
  $region8: #{_lambda_.4} parent=0 // loop_exit
    _

</llo_original>
